<compile_context>
chip_gen: v7x
topology: tpu7x:2x2x1
jax: 0.10.0
libtpu: 0.0.40
codegen_flags: <defaults>
</compile_context>

<pallas_src>
import jax
import jax.numpy as jnp
from jax.experimental import pallas as pl
from jax.experimental.pallas import tpu as pltpu

# ---------------- model / problem sizes ----------------
NUM_USER = 32
NUM_ITEM = 64
NUM_KEYWORD = 16
EMBED_DIM = 32          # D
NUM_LAYER = 2           # hard-coded: 2 hidden layers in the DNN scorer
NUM_NEG_SAMPLE = 2      # NS
BATCH = 32              # total batch of queries per call (one grid step)
MAX_KW = 4              # L (max keywords per query, padded)


def deepfm_kernel(uid_ref, iid_ref, kwid_ref, invq_ref,
                  utab_ref, itab_ref, ktab_ref,
                  w1_ref, b1_ref, w2_ref, b2_ref, wo_ref, bo_ref,
                  pos_ref, loss_ref):
    B = uid_ref.shape[0]
    SB = iid_ref.shape[0]
    S = SB // B                     # 1 + num_neg_sample
    NS = S - 1
    L = kwid_ref.shape[1]
    NU, D = utab_ref.shape
    NI = itab_ref.shape[0]
    NK = ktab_ref.shape[0]
    f32 = jnp.float32

    # ---- fused embedding "gathers": one-hot x table on the MXU (tables are tiny) ----
    u_onehot = (uid_ref[...] ==
                jax.lax.broadcasted_iota(jnp.int32, (B, NU), 1)).astype(f32)
    u = jnp.dot(u_onehot, utab_ref[...], preferred_element_type=f32)          # (B, D)

    i_onehot = (iid_ref[...] ==
                jax.lax.broadcasted_iota(jnp.int32, (SB, NI), 1)).astype(f32)
    items = jnp.dot(i_onehot, itab_ref[...], preferred_element_type=f32)      # (S*B, D): [pos; neg0; neg1; ...]

    # MeanAggregator: keyword-count matrix @ table * (1/query_size).
    # Padding ids (>= NK) match nothing == the zero rows of the extended table.
    kw_iota = jax.lax.broadcasted_iota(jnp.int32, (B, NK), 1)
    counts = jnp.zeros((B, NK), f32)
    for l in range(L):                                        # tiny static unroll
        counts = counts + (kwid_ref[:, l:l + 1] == kw_iota).astype(f32)
    k_agg = (jnp.dot(counts, ktab_ref[...], preferred_element_type=f32)
             * invq_ref[...])                                                  # (B, D)

    # ---- item-invariant pieces, computed once (hoisted + merged matmul) ----
    # concat(u, it, k) @ W1 == [u, k] @ [W1_u; W1_k]  +  it @ W1_i
    w1_uk = jnp.concatenate([w1_ref[0:D, :], w1_ref[2 * D:3 * D, :]], axis=0)  # (2D, D)
    uk_in = jnp.concatenate([u, k_agg], axis=-1)                               # (B, 2D)
    h0 = jnp.dot(uk_in, w1_uk, preferred_element_type=f32) + b1_ref[...]       # (B, D)
    uk = u + k_agg                                   # <u,it> + <it,k> == <it, u + k_agg>
    fm_uk = jnp.sum(u * k_agg, axis=-1, keepdims=True)                         # (B, 1)

    # ---- one stacked pass over positive + all negative items ----
    w1_i = w1_ref[D:2 * D, :]
    z1 = jnp.dot(items, w1_i, preferred_element_type=f32)                      # (S*B, D)
    h1 = jnp.maximum(z1.reshape(S, B, D) + h0[None], 0.0)                      # broadcast h0 (no S-fold copies)
    z2 = jnp.dot(h1.reshape(SB, D), w2_ref[...], preferred_element_type=f32)
    h2 = jnp.maximum(z2 + b2_ref[...], 0.0)                                    # (S*B, D)
    # 1-column output head as VPU multiply + lane reduce (no tiny MXU matmul).
    dnn = (jnp.sum(h2.reshape(S, B, D) * wo_ref[...], axis=-1, keepdims=True)
           + bo_ref[...])                                                      # (S, B, 1)
    # FM pairwise-interaction scorer (DotProd3DScorer)
    fm = (jnp.sum(items.reshape(S, B, D) * uk[None], axis=-1, keepdims=True)
          + fm_uk[None])                                                       # (S, B, 1)
    scores = fm + dnn                                                          # (S, B, 1)

    pos = scores[0]                                                            # (B, 1)
    pos_ref[...] = pos

    # Stable softplus(neg - pos) == -logsigmoid(pos - neg) (PyTorch BPR term),
    # reduced to the final scalar loss in-kernel.
    x = scores[1:] - pos[None]                                                 # (NS, B, 1)
    sp = jnp.maximum(x, 0.0) + jnp.log(1.0 + jnp.exp(-jnp.abs(x)))
    loss_sum = jnp.sum(sp.reshape(NS * B, 1), axis=0, keepdims=True)           # (1, 1)
    loss_ref[...] = loss_sum * (1.0 / (NS * B))


def deepfm_forward(user_ids, item_ids, neg_item_ids, keyword_ids, query_sizes,
                   user_table, item_table, kw_table, w1, b1, w2, b2, wo, bo):
    B = user_ids.shape[0]
    NS = neg_item_ids.shape[0]
    S = NS + 1
    L = keyword_ids.shape[1]
    NU, D = user_table.shape
    NI = item_table.shape[0]
    NK = kw_table.shape[0]

    uid = user_ids.astype(jnp.int32).reshape(B, 1)
    # [pos ids ; neg_0 ids ; neg_1 ids ; ...] as one (S*B, 1) column.
    iid = jnp.concatenate([item_ids.reshape(-1), neg_item_ids.reshape(-1)]
                          ).astype(jnp.int32).reshape(S * B, 1)
    kwid = keyword_ids.astype(jnp.int32)
    invq = (1.0 / query_sizes.astype(jnp.float32)).reshape(B, 1)
    wo_row = wo.reshape(1, D)

    def full(shape):
        return pl.BlockSpec(shape, lambda b: (0,) * len(shape))

    out_shapes = (
        jax.ShapeDtypeStruct((B, 1), jnp.float32),     # positive scores
        jax.ShapeDtypeStruct((1, 1), jnp.float32),     # BPR loss (scalar)
    )

    pos, loss = pl.pallas_call(
        deepfm_kernel,
        out_shape=out_shapes,
        grid_spec=pltpu.PrefetchScalarGridSpec(
            num_scalar_prefetch=0,
            grid=(1,),                                 # whole batch = one step
            in_specs=[
                full((B, 1)),                          # user ids
                full((S * B, 1)),                      # stacked item ids (pos + negs)
                full((B, L)),                          # keyword ids (padded)
                full((B, 1)),                          # 1 / query_size
                full((NU, D)),                         # user embedding table
                full((NI, D)),                         # item embedding table
                full((NK, D)),                         # keyword embedding table
                full((3 * D, D)),                      # W1
                full((1, D)),                          # b1
                full((D, D)),                          # W2
                full((1, D)),                          # b2
                full((1, D)),                          # Wo (as row)
                full((1, 1)),                          # bo
            ],
            out_specs=[full((B, 1)), full((1, 1))],
        ),
        compiler_params=pltpu.CompilerParams(
            dimension_semantics=("arbitrary",)),
    )(uid, iid, kwid, invq, user_table, item_table, kw_table,
      w1, b1, w2, b2, wo_row, bo)
    return loss, pos


def reference(user_table, item_table, kw_table, user_ids, item_ids, neg_item_ids,
              keyword_ids, query_sizes, w1, b1, w2, b2, wo, bo):
    """Plain-JAX reference with the same forward semantics as the PyTorch model."""
    D = user_table.shape[1]
    ext_kw = jnp.concatenate([kw_table, jnp.zeros((2, D), kw_table.dtype)], axis=0)
    u = user_table[user_ids]                                     # (B, D)
    kw_emb = ext_kw[keyword_ids]                                 # (B, L, D)
    k_agg = jnp.sum(kw_emb, axis=1) / query_sizes.astype(jnp.float32)[:, None]

    def score(it):
        fm = (jnp.sum(u * it, -1, keepdims=True)
              + jnp.sum(u * k_agg, -1, keepdims=True)
              + jnp.sum(it * k_agg, -1, keepdims=True))
        x = jnp.concatenate([u, it, k_agg], axis=-1)
        h = jnp.maximum(x @ w1 + b1, 0.0)
        h = jnp.maximum(h @ w2 + b2, 0.0)
        return fm + (h @ wo + bo)

    pos = score(item_table[item_ids])
    loss = 0.0
    for s in range(neg_item_ids.shape[0]):
        neg = score(item_table[neg_item_ids[s]])
        d = neg - pos
        # stable softplus(d) == -logsigmoid(pos - neg)
        loss = loss + jnp.mean(jnp.maximum(d, 0.0) + jnp.log(1.0 + jnp.exp(-jnp.abs(d))))
    return loss / neg_item_ids.shape[0], pos


if __name__ == "__main__":
    B, L, D, NS = BATCH, MAX_KW, EMBED_DIM, NUM_NEG_SAMPLE
    key = jax.random.PRNGKey(0)
    keys = jax.random.split(key, 12)

    # Embedding tables ~ N(0, 1/D), as in the PyTorch __init__.
    user_table = (1.0 / D) * jax.random.normal(keys[0], (NUM_USER, D), jnp.float32)
    item_table = (1.0 / D) * jax.random.normal(keys[1], (NUM_ITEM, D), jnp.float32)
    kw_table = (1.0 / D) * jax.random.normal(keys[2], (NUM_KEYWORD, D), jnp.float32)

    # Dense3DScorer parameters (deterministic init).
    w1 = 0.1 * jax.random.normal(keys[3], (3 * D, D), jnp.float32)
    b1 = jnp.zeros((1, D), jnp.float32)
    w2 = 0.1 * jax.random.normal(keys[4], (D, D), jnp.float32)
    b2 = jnp.zeros((1, D), jnp.float32)
    wo = 0.1 * jax.random.normal(keys[5], (D, 1), jnp.float32)
    bo = jnp.zeros((1, 1), jnp.float32)

    # Batch ids (negative sampling done host-side, like sample_items()).
    user_ids = jax.random.randint(keys[6], (B,), 0, NUM_USER)
    item_ids = jax.random.randint(keys[7], (B,), 0, NUM_ITEM)
    query_sizes = jax.random.randint(keys[8], (B,), 1, L + 1)
    raw_kw_ids = jax.random.randint(keys[9], (B, L), 0, NUM_KEYWORD)
    pad_mask = jnp.arange(L)[None, :] < query_sizes[:, None]
    keyword_ids = jnp.where(pad_mask, raw_kw_ids, NUM_KEYWORD)  # padding -> zero row
    neg_item_ids = jax.random.randint(keys[10], (NS, B), 0, NUM_ITEM)

    fwd = jax.jit(deepfm_forward)
    loss_arr, pos_scores = fwd(user_ids, item_ids, neg_item_ids, keyword_ids,
                               query_sizes, user_table, item_table, kw_table,
                               w1, b1, w2, b2, wo, bo)
    loss_arr = jax.block_until_ready(loss_arr)
    pos_scores = jax.block_until_ready(pos_scores)

    ref_loss, ref_pos = reference(user_table, item_table, kw_table, user_ids,
                                  item_ids, neg_item_ids, keyword_ids,
                                  query_sizes, w1, b1, w2, b2, wo, bo)
    assert jnp.allclose(loss_arr[0, 0], ref_loss, atol=1e-4, rtol=1e-4)
    assert jnp.allclose(pos_scores, ref_pos, atol=1e-4, rtol=1e-4)

    print("KERNEL_OK")
</pallas_src>

<mosaic_0001>
module attributes {stable_mosaic.version = 11 : i64} {
  func.func @deepfm_kernel(%arg0: i32, %arg1: memref<32x1xi32, #tpu.memory_space<vmem>>, %arg2: memref<96x1xi32, #tpu.memory_space<vmem>>, %arg3: memref<32x4xi32, #tpu.memory_space<vmem>>, %arg4: memref<32x1xf32, #tpu.memory_space<vmem>>, %arg5: memref<32x32xf32, #tpu.memory_space<vmem>>, %arg6: memref<64x32xf32, #tpu.memory_space<vmem>>, %arg7: memref<16x32xf32, #tpu.memory_space<vmem>>, %arg8: memref<96x32xf32, #tpu.memory_space<vmem>>, %arg9: memref<1x32xf32, #tpu.memory_space<vmem>>, %arg10: memref<32x32xf32, #tpu.memory_space<vmem>>, %arg11: memref<1x32xf32, #tpu.memory_space<vmem>>, %arg12: memref<1x32xf32, #tpu.memory_space<vmem>>, %arg13: memref<1x1xf32, #tpu.memory_space<vmem>>, %arg14: memref<32x1xf32, #tpu.memory_space<vmem>>, %arg15: memref<1x1xf32, #tpu.memory_space<vmem>>) attributes {dimension_semantics = [#tpu.dimension_semantics<arbitrary>], iteration_bounds = array<i64: 1>, scalar_prefetch = 0 : i64, scratch_operands = 0 : i64, tpu.core_type = #tpu.core_type<tc>, window_params = [{pipeline_mode = #tpu.pipeline_mode<synchronous>, transform_indices = @transform_0, window_bounds = array<i64: 32, 1>}, {pipeline_mode = #tpu.pipeline_mode<synchronous>, transform_indices = @transform_1, window_bounds = array<i64: 96, 1>}, {pipeline_mode = #tpu.pipeline_mode<synchronous>, transform_indices = @transform_2, window_bounds = array<i64: 32, 4>}, {pipeline_mode = #tpu.pipeline_mode<synchronous>, transform_indices = @transform_3, window_bounds = array<i64: 32, 1>}, {pipeline_mode = #tpu.pipeline_mode<synchronous>, transform_indices = @transform_4, window_bounds = array<i64: 32, 32>}, {pipeline_mode = #tpu.pipeline_mode<synchronous>, transform_indices = @transform_5, window_bounds = array<i64: 64, 32>}, {pipeline_mode = #tpu.pipeline_mode<synchronous>, transform_indices = @transform_6, window_bounds = array<i64: 16, 32>}, {pipeline_mode = #tpu.pipeline_mode<synchronous>, transform_indices = @transform_7, window_bounds = array<i64: 96, 32>}, {pipeline_mode = #tpu.pipeline_mode<synchronous>, transform_indices = @transform_8, window_bounds = array<i64: 1, 32>}, {pipeline_mode = #tpu.pipeline_mode<synchronous>, transform_indices = @transform_9, window_bounds = array<i64: 32, 32>}, {pipeline_mode = #tpu.pipeline_mode<synchronous>, transform_indices = @transform_10, window_bounds = array<i64: 1, 32>}, {pipeline_mode = #tpu.pipeline_mode<synchronous>, transform_indices = @transform_11, window_bounds = array<i64: 1, 32>}, {pipeline_mode = #tpu.pipeline_mode<synchronous>, transform_indices = @transform_12, window_bounds = array<i64: 1, 1>}, {pipeline_mode = #tpu.pipeline_mode<synchronous>, transform_indices = @transform_13, window_bounds = array<i64: 32, 1>}, {pipeline_mode = #tpu.pipeline_mode<synchronous>, transform_indices = @transform_14, window_bounds = array<i64: 1, 1>}]} {
    %c0 = arith.constant 0 : index
    %c0_0 = arith.constant 0 : index
    %0 = vector.load %arg1[%c0, %c0_0] : memref<32x1xi32, #tpu.memory_space<vmem>>, vector<32x1xi32>
    %1 = tpu.iota {dimensions = array<i32: 1>} : vector<32x32xi32>
    %2 = vector.broadcast %0 : vector<32x1xi32> to vector<32x32xi32>
    %3 = arith.cmpi eq, %2, %1 : vector<32x32xi32>
    %4 = arith.extui %3 : vector<32x32xi1> to vector<32x32xi32>
    %5 = arith.sitofp %4 : vector<32x32xi32> to vector<32x32xf32>
    %c0_1 = arith.constant 0 : index
    %c0_2 = arith.constant 0 : index
    %6 = vector.load %arg5[%c0_1, %c0_2] : memref<32x32xf32, #tpu.memory_space<vmem>>, vector<32x32xf32>
    %cst = arith.constant dense<0.000000e+00> : vector<32x32xf32>
    %7 = tpu.matmul %5, %6, %cst {dimension_numbers = #tpu.dot_dimension_numbers<[1], [0], [0], [1], [0, 0, 1, 1], [], []>} : vector<32x32xf32>, vector<32x32xf32>, vector<32x32xf32> -> vector<32x32xf32>
    %c0_3 = arith.constant 0 : index
    %c0_4 = arith.constant 0 : index
    %8 = vector.load %arg2[%c0_3, %c0_4] : memref<96x1xi32, #tpu.memory_space<vmem>>, vector<96x1xi32>
    %9 = tpu.iota {dimensions = array<i32: 1>} : vector<96x64xi32>
    %10 = vector.broadcast %8 : vector<96x1xi32> to vector<96x64xi32>
    %11 = arith.cmpi eq, %10, %9 : vector<96x64xi32>
    %12 = arith.extui %11 : vector<96x64xi1> to vector<96x64xi32>
    %13 = arith.sitofp %12 : vector<96x64xi32> to vector<96x64xf32>
    %c0_5 = arith.constant 0 : index
    %c0_6 = arith.constant 0 : index
    %14 = vector.load %arg6[%c0_5, %c0_6] : memref<64x32xf32, #tpu.memory_space<vmem>>, vector<64x32xf32>
    %cst_7 = arith.constant dense<0.000000e+00> : vector<96x32xf32>
    %15 = tpu.matmul %13, %14, %cst_7 {dimension_numbers = #tpu.dot_dimension_numbers<[1], [0], [0], [1], [0, 0, 1, 1], [], []>} : vector<96x64xf32>, vector<64x32xf32>, vector<96x32xf32> -> vector<96x32xf32>
    %16 = tpu.iota {dimensions = array<i32: 1>} : vector<32x16xi32>
    %cst_8 = arith.constant 0.000000e+00 : f32
    %17 = vector.broadcast %cst_8 : f32 to vector<32x16xf32>
    %c0_9 = arith.constant 0 : index
    %c0_10 = arith.constant 0 : index
    %18 = vector.load %arg3[%c0_9, %c0_10] : memref<32x4xi32, #tpu.memory_space<vmem>>, vector<32x1xi32>
    %19 = vector.broadcast %18 : vector<32x1xi32> to vector<32x16xi32>
    %20 = arith.cmpi eq, %19, %16 : vector<32x16xi32>
    %21 = arith.extui %20 : vector<32x16xi1> to vector<32x16xi32>
    %22 = arith.sitofp %21 : vector<32x16xi32> to vector<32x16xf32>
    %23 = arith.addf %17, %22 : vector<32x16xf32>
    %c0_11 = arith.constant 0 : index
    %c1 = arith.constant 1 : index
    %24 = vector.load %arg3[%c0_11, %c1] : memref<32x4xi32, #tpu.memory_space<vmem>>, vector<32x1xi32>
    %25 = vector.broadcast %24 : vector<32x1xi32> to vector<32x16xi32>
    %26 = arith.cmpi eq, %25, %16 : vector<32x16xi32>
    %27 = arith.extui %26 : vector<32x16xi1> to vector<32x16xi32>
    %28 = arith.sitofp %27 : vector<32x16xi32> to vector<32x16xf32>
    %29 = arith.addf %23, %28 : vector<32x16xf32>
    %c0_12 = arith.constant 0 : index
    %c2 = arith.constant 2 : index
    %30 = vector.load %arg3[%c0_12, %c2] : memref<32x4xi32, #tpu.memory_space<vmem>>, vector<32x1xi32>
    %31 = vector.broadcast %30 : vector<32x1xi32> to vector<32x16xi32>
    %32 = arith.cmpi eq, %31, %16 : vector<32x16xi32>
    %33 = arith.extui %32 : vector<32x16xi1> to vector<32x16xi32>
    %34 = arith.sitofp %33 : vector<32x16xi32> to vector<32x16xf32>
    %35 = arith.addf %29, %34 : vector<32x16xf32>
    %c0_13 = arith.constant 0 : index
    %c3 = arith.constant 3 : index
    %36 = vector.load %arg3[%c0_13, %c3] : memref<32x4xi32, #tpu.memory_space<vmem>>, vector<32x1xi32>
    %37 = vector.broadcast %36 : vector<32x1xi32> to vector<32x16xi32>
    %38 = arith.cmpi eq, %37, %16 : vector<32x16xi32>
    %39 = arith.extui %38 : vector<32x16xi1> to vector<32x16xi32>
    %40 = arith.sitofp %39 : vector<32x16xi32> to vector<32x16xf32>
    %41 = arith.addf %35, %40 : vector<32x16xf32>
    %c0_14 = arith.constant 0 : index
    %c0_15 = arith.constant 0 : index
    %42 = vector.load %arg7[%c0_14, %c0_15] : memref<16x32xf32, #tpu.memory_space<vmem>>, vector<16x32xf32>
    %cst_16 = arith.constant dense<0.000000e+00> : vector<32x32xf32>
    %43 = tpu.matmul %41, %42, %cst_16 {dimension_numbers = #tpu.dot_dimension_numbers<[1], [0], [0], [1], [0, 0, 1, 1], [], []>} : vector<32x16xf32>, vector<16x32xf32>, vector<32x32xf32> -> vector<32x32xf32>
    %c0_17 = arith.constant 0 : index
    %c0_18 = arith.constant 0 : index
    %44 = vector.load %arg4[%c0_17, %c0_18] : memref<32x1xf32, #tpu.memory_space<vmem>>, vector<32x1xf32>
    %45 = vector.broadcast %44 : vector<32x1xf32> to vector<32x32xf32>
    %46 = arith.mulf %43, %45 : vector<32x32xf32>
    %c0_19 = arith.constant 0 : index
    %c0_20 = arith.constant 0 : index
    %47 = vector.load %arg8[%c0_19, %c0_20] : memref<96x32xf32, #tpu.memory_space<vmem>>, vector<32x32xf32>
    %c64 = arith.constant 64 : index
    %c0_21 = arith.constant 0 : index
    %48 = vector.load %arg8[%c64, %c0_21] : memref<96x32xf32, #tpu.memory_space<vmem>>, vector<32x32xf32>
    %49 = tpu.concatenate %47, %48 in 0 : vector<32x32xf32>, vector<32x32xf32> -> vector<64x32xf32>
    %50 = tpu.concatenate %7, %46 in 1 : vector<32x32xf32>, vector<32x32xf32> -> vector<32x64xf32>
    %cst_22 = arith.constant dense<0.000000e+00> : vector<32x32xf32>
    %51 = tpu.matmul %50, %49, %cst_22 {dimension_numbers = #tpu.dot_dimension_numbers<[1], [0], [0], [1], [0, 0, 1, 1], [], []>} : vector<32x64xf32>, vector<64x32xf32>, vector<32x32xf32> -> vector<32x32xf32>
    %c0_23 = arith.constant 0 : index
    %c0_24 = arith.constant 0 : index
    %52 = vector.load %arg9[%c0_23, %c0_24] : memref<1x32xf32, #tpu.memory_space<vmem>>, vector<1x32xf32>
    %53 = vector.broadcast %52 : vector<1x32xf32> to vector<32x32xf32>
    %54 = arith.addf %51, %53 : vector<32x32xf32>
    %55 = arith.addf %7, %46 : vector<32x32xf32>
    %56 = arith.mulf %7, %46 : vector<32x32xf32>
    %cst_25 = arith.constant dense<0.000000e+00> : vector<32xf32>
    %57 = vector.multi_reduction <add>, %56, %cst_25 [1] : vector<32x32xf32> to vector<32xf32>
    %58 = vector.shape_cast %57 : vector<32xf32> to vector<32x1xf32>
    %c32 = arith.constant 32 : index
    %c0_26 = arith.constant 0 : index
    %59 = vector.load %arg8[%c32, %c0_26] : memref<96x32xf32, #tpu.memory_space<vmem>>, vector<32x32xf32>
    %cst_27 = arith.constant dense<0.000000e+00> : vector<96x32xf32>
    %60 = tpu.matmul %15, %59, %cst_27 {dimension_numbers = #tpu.dot_dimension_numbers<[1], [0], [0], [1], [0, 0, 1, 1], [], []>} : vector<96x32xf32>, vector<32x32xf32>, vector<96x32xf32> -> vector<96x32xf32>
    %61 = vector.shape_cast %60 : vector<96x32xf32> to vector<3x32x32xf32>
    %62 = vector.shape_cast %54 : vector<32x32xf32> to vector<1x32x32xf32>
    %63 = vector.broadcast %62 : vector<1x32x32xf32> to vector<3x32x32xf32>
    %64 = arith.addf %61, %63 : vector<3x32x32xf32>
    %cst_28 = arith.constant 0.000000e+00 : f32
    %65 = vector.broadcast %cst_28 : f32 to vector<3x32x32xf32>
    %66 = arith.maximumf %64, %65 : vector<3x32x32xf32>
    %67 = vector.shape_cast %66 : vector<3x32x32xf32> to vector<96x32xf32>
    %c0_29 = arith.constant 0 : index
    %c0_30 = arith.constant 0 : index
    %68 = vector.load %arg10[%c0_29, %c0_30] : memref<32x32xf32, #tpu.memory_space<vmem>>, vector<32x32xf32>
    %cst_31 = arith.constant dense<0.000000e+00> : vector<96x32xf32>
    %69 = tpu.matmul %67, %68, %cst_31 {dimension_numbers = #tpu.dot_dimension_numbers<[1], [0], [0], [1], [0, 0, 1, 1], [], []>} : vector<96x32xf32>, vector<32x32xf32>, vector<96x32xf32> -> vector<96x32xf32>
    %c0_32 = arith.constant 0 : index
    %c0_33 = arith.constant 0 : index
    %70 = vector.load %arg11[%c0_32, %c0_33] : memref<1x32xf32, #tpu.memory_space<vmem>>, vector<1x32xf32>
    %71 = vector.broadcast %70 : vector<1x32xf32> to vector<96x32xf32>
    %72 = arith.addf %69, %71 : vector<96x32xf32>
    %cst_34 = arith.constant 0.000000e+00 : f32
    %73 = vector.broadcast %cst_34 : f32 to vector<96x32xf32>
    %74 = arith.maximumf %72, %73 : vector<96x32xf32>
    %75 = vector.shape_cast %74 : vector<96x32xf32> to vector<3x32x32xf32>
    %c0_35 = arith.constant 0 : index
    %c0_36 = arith.constant 0 : index
    %76 = vector.load %arg12[%c0_35, %c0_36] : memref<1x32xf32, #tpu.memory_space<vmem>>, vector<1x32xf32>
    %77 = vector.shape_cast %76 : vector<1x32xf32> to vector<1x1x32xf32>
    %78 = vector.broadcast %77 : vector<1x1x32xf32> to vector<3x32x32xf32>
    %79 = arith.mulf %75, %78 : vector<3x32x32xf32>
    %cst_37 = arith.constant dense<0.000000e+00> : vector<3x32xf32>
    %80 = vector.multi_reduction <add>, %79, %cst_37 [2] : vector<3x32x32xf32> to vector<3x32xf32>
    %81 = vector.shape_cast %80 : vector<3x32xf32> to vector<3x32x1xf32>
    %c0_38 = arith.constant 0 : index
    %c0_39 = arith.constant 0 : index
    %82 = vector.load %arg13[%c0_38, %c0_39] : memref<1x1xf32, #tpu.memory_space<vmem>>, vector<1x1xf32>
    %83 = vector.shape_cast %82 : vector<1x1xf32> to vector<1x1x1xf32>
    %84 = vector.broadcast %83 : vector<1x1x1xf32> to vector<3x32x1xf32>
    %85 = arith.addf %81, %84 : vector<3x32x1xf32>
    %86 = vector.shape_cast %15 : vector<96x32xf32> to vector<3x32x32xf32>
    %87 = vector.shape_cast %55 : vector<32x32xf32> to vector<1x32x32xf32>
    %88 = vector.broadcast %87 : vector<1x32x32xf32> to vector<3x32x32xf32>
    %89 = arith.mulf %86, %88 : vector<3x32x32xf32>
    %cst_40 = arith.constant dense<0.000000e+00> : vector<3x32xf32>
    %90 = vector.multi_reduction <add>, %89, %cst_40 [2] : vector<3x32x32xf32> to vector<3x32xf32>
    %91 = vector.shape_cast %90 : vector<3x32xf32> to vector<3x32x1xf32>
    %92 = vector.shape_cast %58 : vector<32x1xf32> to vector<1x32x1xf32>
    %93 = vector.broadcast %92 : vector<1x32x1xf32> to vector<3x32x1xf32>
    %94 = arith.addf %91, %93 : vector<3x32x1xf32>
    %95 = arith.addf %94, %85 : vector<3x32x1xf32>
    %96 = vector.extract_strided_slice %95 {offsets = [0, 0, 0], sizes = [1, 32, 1], strides = [1, 1, 1]} : vector<3x32x1xf32> to vector<1x32x1xf32>
    %97 = vector.shape_cast %96 : vector<1x32x1xf32> to vector<32x1xf32>
    %c0_41 = arith.constant 0 : index
    %c0_42 = arith.constant 0 : index
    %98 = vector.load %arg14[%c0_41, %c0_42] : memref<32x1xf32, #tpu.memory_space<vmem>>, vector<32x1xf32>
    tpu.vector_store %arg14[%c0_41, %c0_42], %97 {strides = array<i32>} : memref<32x1xf32, #tpu.memory_space<vmem>>, vector<32x1xf32>,
    %99 = vector.extract_strided_slice %95 {offsets = [1, 0, 0], sizes = [2, 32, 1], strides = [1, 1, 1]} : vector<3x32x1xf32> to vector<2x32x1xf32>
    %100 = vector.shape_cast %97 : vector<32x1xf32> to vector<1x32x1xf32>
    %101 = vector.broadcast %100 : vector<1x32x1xf32> to vector<2x32x1xf32>
    %102 = arith.subf %99, %101 : vector<2x32x1xf32>
    %cst_43 = arith.constant 0.000000e+00 : f32
    %103 = vector.broadcast %cst_43 : f32 to vector<2x32x1xf32>
    %104 = arith.maximumf %102, %103 : vector<2x32x1xf32>
    %105 = math.absf %102 : vector<2x32x1xf32>
    %cst_44 = arith.constant 0.000000e+00 : f32
    %106 = vector.broadcast %cst_44 : f32 to vector<2x32x1xf32>
    %107 = arith.subf %106, %105 : vector<2x32x1xf32>
    %108 = math.exp %107 : vector<2x32x1xf32>
    %cst_45 = arith.constant 1.000000e+00 : f32
    %109 = vector.broadcast %cst_45 : f32 to vector<2x32x1xf32>
    %110 = arith.addf %109, %108 : vector<2x32x1xf32>
    %111 = math.log %110 : vector<2x32x1xf32>
    %112 = arith.addf %104, %111 : vector<2x32x1xf32>
    %113 = vector.shape_cast %112 : vector<2x32x1xf32> to vector<64x1xf32>
    %cst_46 = arith.constant dense<0.000000e+00> : vector<1xf32>
    %114 = vector.multi_reduction <add>, %113, %cst_46 [0] : vector<64x1xf32> to vector<1xf32>
    %115 = vector.shape_cast %114 : vector<1xf32> to vector<1x1xf32>
    %cst_47 = arith.constant 1.562500e-02 : f32
    %116 = vector.broadcast %cst_47 : f32 to vector<1x1xf32>
    %117 = arith.mulf %115, %116 : vector<1x1xf32>
    %c0_48 = arith.constant 0 : index
    %c0_49 = arith.constant 0 : index
    %118 = vector.load %arg15[%c0_48, %c0_49] : memref<1x1xf32, #tpu.memory_space<vmem>>, vector<1x1xf32>
    tpu.vector_store %arg15[%c0_48, %c0_49], %117 {strides = array<i32>} : memref<1x1xf32, #tpu.memory_space<vmem>>, vector<1x1xf32>,
    return
  }
  func.func @transform_0(%arg0: i32) -> (i32, i32) {
    %c0_i32 = arith.constant 0 : i32
    %c0_i32_0 = arith.constant 0 : i32
    %c0_i32_1 = arith.constant 0 : i32
    return %c0_i32, %c0_i32_0 : i32, i32
  }
  func.func @transform_1(%arg0: i32) -> (i32, i32) {
    %c0_i32 = arith.constant 0 : i32
    %c0_i32_0 = arith.constant 0 : i32
    %c0_i32_1 = arith.constant 0 : i32
    return %c0_i32, %c0_i32_0 : i32, i32
  }
  func.func @transform_2(%arg0: i32) -> (i32, i32) {
    %c0_i32 = arith.constant 0 : i32
    %c0_i32_0 = arith.constant 0 : i32
    %c0_i32_1 = arith.constant 0 : i32
    return %c0_i32, %c0_i32_0 : i32, i32
  }
  func.func @transform_3(%arg0: i32) -> (i32, i32) {
    %c0_i32 = arith.constant 0 : i32
    %c0_i32_0 = arith.constant 0 : i32
    %c0_i32_1 = arith.constant 0 : i32
    return %c0_i32, %c0_i32_0 : i32, i32
  }
  func.func @transform_4(%arg0: i32) -> (i32, i32) {
    %c0_i32 = arith.constant 0 : i32
    %c0_i32_0 = arith.constant 0 : i32
    %c0_i32_1 = arith.constant 0 : i32
    return %c0_i32, %c0_i32_0 : i32, i32
  }
  func.func @transform_5(%arg0: i32) -> (i32, i32) {
    %c0_i32 = arith.constant 0 : i32
    %c0_i32_0 = arith.constant 0 : i32
    %c0_i32_1 = arith.constant 0 : i32
    return %c0_i32, %c0_i32_0 : i32, i32
  }
  func.func @transform_6(%arg0: i32) -> (i32, i32) {
    %c0_i32 = arith.constant 0 : i32
    %c0_i32_0 = arith.constant 0 : i32
    %c0_i32_1 = arith.constant 0 : i32
    return %c0_i32, %c0_i32_0 : i32, i32
  }
  func.func @transform_7(%arg0: i32) -> (i32, i32) {
    %c0_i32 = arith.constant 0 : i32
    %c0_i32_0 = arith.constant 0 : i32
    %c0_i32_1 = arith.constant 0 : i32
    return %c0_i32, %c0_i32_0 : i32, i32
  }
  func.func @transform_8(%arg0: i32) -> (i32, i32) {
    %c0_i32 = arith.constant 0 : i32
    %c0_i32_0 = arith.constant 0 : i32
    %c0_i32_1 = arith.constant 0 : i32
    return %c0_i32, %c0_i32_0 : i32, i32
  }
  func.func @transform_9(%arg0: i32) -> (i32, i32) {
    %c0_i32 = arith.constant 0 : i32
    %c0_i32_0 = arith.constant 0 : i32
    %c0_i32_1 = arith.constant 0 : i32
    return %c0_i32, %c0_i32_0 : i32, i32
  }
  func.func @transform_10(%arg0: i32) -> (i32, i32) {
    %c0_i32 = arith.constant 0 : i32
    %c0_i32_0 = arith.constant 0 : i32
    %c0_i32_1 = arith.constant 0 : i32
    return %c0_i32, %c0_i32_0 : i32, i32
  }
  func.func @transform_11(%arg0: i32) -> (i32, i32) {
    %c0_i32 = arith.constant 0 : i32
    %c0_i32_0 = arith.constant 0 : i32
    %c0_i32_1 = arith.constant 0 : i32
    return %c0_i32, %c0_i32_0 : i32, i32
  }
  func.func @transform_12(%arg0: i32) -> (i32, i32) {
    %c0_i32 = arith.constant 0 : i32
    %c0_i32_0 = arith.constant 0 : i32
    %c0_i32_1 = arith.constant 0 : i32
    return %c0_i32, %c0_i32_0 : i32, i32
  }
  func.func @transform_13(%arg0: i32) -> (i32, i32) {
    %c0_i32 = arith.constant 0 : i32
    %c0_i32_0 = arith.constant 0 : i32
    %c0_i32_1 = arith.constant 0 : i32
    return %c0_i32, %c0_i32_0 : i32, i32
  }
  func.func @transform_14(%arg0: i32) -> (i32, i32) {
    %c0_i32 = arith.constant 0 : i32
    %c0_i32_0 = arith.constant 0 : i32
    %c0_i32_1 = arith.constant 0 : i32
    return %c0_i32, %c0_i32_0 : i32, i32
  }
}

</mosaic_0001>

<llo_original>
// kernel: deepfm_forward.1
$region0: #{deepfm_forward.1}
  #allocation0 [shape = 'u32[]', space=smem, size = 0x4, offset = 0x4, fixed_abs, tag = 'smem constant byte address 0x4 - core index']
  #allocation1 [shape = 'u32[144,128]{1,0:T(1,128)}', space=vmem, size = 0x12000, scoped, tag = 'internal scratch']
  #allocation2 [shape = 'f32[1,1]{1,0:T(1,128)S(1)}', space=vmem, size = 0x200, scoped, tag = 'scoped memory for deepfm_forward.1']
  %s0 = inlined_call_operand.vmem [shape: s32[32,1], index: 0, kind: input, shape index: {}]
  %s1 = inlined_call_operand.vmem [shape: s32[96,1], index: 1, kind: input, shape index: {}]
  %s2 = inlined_call_operand.vmem [shape: s32[32,4], index: 2, kind: input, shape index: {}]
  %s3 = inlined_call_operand.vmem [shape: f32[32,1], index: 3, kind: input, shape index: {}]
  %s4 = inlined_call_operand.vmem [shape: f32[32,32], index: 4, kind: input, shape index: {}]
  %s5 = inlined_call_operand.vmem [shape: f32[64,32], index: 5, kind: input, shape index: {}]
  %s6 = inlined_call_operand.vmem [shape: f32[16,32], index: 6, kind: input, shape index: {}]
  %s7 = inlined_call_operand.vmem [shape: f32[96,32], index: 7, kind: input, shape index: {}]
  %s8 = inlined_call_operand.vmem [shape: f32[1,32], index: 8, kind: input, shape index: {}]
  %s9 = inlined_call_operand.vmem [shape: f32[32,32], index: 9, kind: input, shape index: {}]
  %s10 = inlined_call_operand.vmem [shape: f32[1,32], index: 10, kind: input, shape index: {}]
  %s11 = inlined_call_operand.vmem [shape: f32[1,32], index: 11, kind: input, shape index: {}]
  %s12 = inlined_call_operand.<no memory space> [shape: f32[1,1], index: 12, kind: input, shape index: {}]
  %s13 = inlined_call_operand.vmem [shape: f32[32,1], index: 13, kind: output, shape index: {0}]
  %s14 = inlined_call_operand.hbm [shape: f32[1,1], index: 14, kind: output, shape index: {1}]
  %15 = xla_tuple %s13, %s14
  %s16 = sld [smem:[#allocation0]]
  $region70: #{deepfm_forward.1} parent=0
    _
  %s18 = ssub.s32 1, %s16
  %s19 = scalar_select 0, %s18, %s16
  %v20 = vstv %s12
  %21 = vst [vmem:[#allocation2] sm:$0x1] %v20
  $region1: #{deepfm_forward.1} parent=0
    #allocation3 [shape = 'u8[512]{0}', space=vmem, size = 0x400, scoped, tag = 'output window, operand 1, single buffered']
    #allocation4 [shape = 's32[1]{0}', space=sflag, size = 0x4, scoped, tag = 'scoped memory for deepfm_forward.1']
    %22 = vsyncpa [#allocation4], 0
    // Predicated region
    $region2: #{deepfm_forward.1} parent=1 // pred_check
      _
    $region3: #{deepfm_forward.1} parent=1 // pred_check_branch
      %24 = sbr.rel (0) target = $region5
    $region4: #{deepfm_forward.1} parent=1 // pred_region
      _
    $region5: #{deepfm_forward.1} parent=1 // pred_fallthru
      _
    // Predicated region
    $region6: #{deepfm_forward.1} parent=1 // pred_check
      _
    $region7: #{deepfm_forward.1} parent=1 // pred_check_branch
      %26 = sbr.rel (0) target = $region9
    $region8: #{deepfm_forward.1} parent=1 // pred_region
      _
    $region9: #{deepfm_forward.1} parent=1 // pred_fallthru
      _
    // Predicated region
    $region10: #{deepfm_forward.1} parent=1 // pred_check
      _
    $region11: #{deepfm_forward.1} parent=1 // pred_check_branch
      %28 = sbr.rel (0) target = $region13
    $region12: #{deepfm_forward.1} parent=1 // pred_region
      _
    $region13: #{deepfm_forward.1} parent=1 // pred_fallthru
      _
    // Predicated region
    $region14: #{deepfm_forward.1} parent=1 // pred_check
      _
    $region15: #{deepfm_forward.1} parent=1 // pred_check_branch
      %30 = sbr.rel (0) target = $region17
    $region16: #{deepfm_forward.1} parent=1 // pred_region
      _
    $region17: #{deepfm_forward.1} parent=1 // pred_fallthru
      _
    // Predicated region
    $region18: #{deepfm_forward.1} parent=1 // pred_check
      _
    $region19: #{deepfm_forward.1} parent=1 // pred_check_branch
      %32 = sbr.rel (0) target = $region21
    $region20: #{deepfm_forward.1} parent=1 // pred_region
      _
    $region21: #{deepfm_forward.1} parent=1 // pred_fallthru
      _
    // Predicated region
    $region22: #{deepfm_forward.1} parent=1 // pred_check
      _
    $region23: #{deepfm_forward.1} parent=1 // pred_check_branch
      %34 = sbr.rel (0) target = $region25
    $region24: #{deepfm_forward.1} parent=1 // pred_region
      _
    $region25: #{deepfm_forward.1} parent=1 // pred_fallthru
      _
    // Predicated region
    $region26: #{deepfm_forward.1} parent=1 // pred_check
      _
    $region27: #{deepfm_forward.1} parent=1 // pred_check_branch
      %36 = sbr.rel (0) target = $region29
    $region28: #{deepfm_forward.1} parent=1 // pred_region
      _
    $region29: #{deepfm_forward.1} parent=1 // pred_fallthru
      _
    // Predicated region
    $region30: #{deepfm_forward.1} parent=1 // pred_check
      _
    $region31: #{deepfm_forward.1} parent=1 // pred_check_branch
      %38 = sbr.rel (0) target = $region33
    $region32: #{deepfm_forward.1} parent=1 // pred_region
      _
    $region33: #{deepfm_forward.1} parent=1 // pred_fallthru
      _
    // Predicated region
    $region34: #{deepfm_forward.1} parent=1 // pred_check
      _
    $region35: #{deepfm_forward.1} parent=1 // pred_check_branch
      %40 = sbr.rel (0) target = $region37
    $region36: #{deepfm_forward.1} parent=1 // pred_region
      _
    $region37: #{deepfm_forward.1} parent=1 // pred_fallthru
      _
    // Predicated region
    $region38: #{deepfm_forward.1} parent=1 // pred_check
      _
    $region39: #{deepfm_forward.1} parent=1 // pred_check_branch
      %42 = sbr.rel (0) target = $region41
    $region40: #{deepfm_forward.1} parent=1 // pred_region
      _
    $region41: #{deepfm_forward.1} parent=1 // pred_fallthru
      _
    // Predicated region
    $region42: #{deepfm_forward.1} parent=1 // pred_check
      _
    $region43: #{deepfm_forward.1} parent=1 // pred_check_branch
      %44 = sbr.rel (0) target = $region45
    $region44: #{deepfm_forward.1} parent=1 // pred_region
      _
    $region45: #{deepfm_forward.1} parent=1 // pred_fallthru
      _
    // Predicated region
    $region46: #{deepfm_forward.1} parent=1 // pred_check
      _
    $region47: #{deepfm_forward.1} parent=1 // pred_check_branch
      %46 = sbr.rel (0) target = $region49
    $region48: #{deepfm_forward.1} parent=1 // pred_region
      _
    $region49: #{deepfm_forward.1} parent=1 // pred_fallthru
      _
    // Predicated region
    $region50: #{deepfm_forward.1} parent=1 // pred_check
      _
    $region51: #{deepfm_forward.1} parent=1 // pred_check_branch
      %48 = sbr.rel (0) target = $region53
    $region52: #{deepfm_forward.1} parent=1 // pred_region
      _
    $region53: #{deepfm_forward.1} parent=1 // pred_fallthru
      _
    %v49 = vld [vmem:[%s0] sm:$0xff]
    %v50 = vld [vmem:[%s0 + $0x8] sm:$0xff]
    %v51 = vld [vmem:[%s0 + $0x10] sm:$0xff]
    %v52 = vld [vmem:[%s0 + $0x18] sm:$0xff]
    %v53 = vlaneseq
    %v54 = vand.u32 %v53, 127
    %55 = vset.pattern.permute.xlu0 0
    %56 = vperm.xlu0 %55, %v49
    %v57 = vpop.permute.xlu0 %56
    %58 = vset.pattern.permute.xlu0 0
    %59 = vperm.xlu0 %58, %v50
    %v60 = vpop.permute.xlu0 %59
    %61 = vset.pattern.permute.xlu0 0
    %62 = vperm.xlu0 %61, %v51
    %v63 = vpop.permute.xlu0 %62
    %64 = vset.pattern.permute.xlu0 0
    %65 = vperm.xlu0 %64, %v52
    %v66 = vpop.permute.xlu0 %65
    %vm67 = vcmp.eq.s32.totalorder %v57, %v54
    %vm68 = vcmp.eq.s32.totalorder %v60, %v54
    %vm69 = vcmp.eq.s32.totalorder %v63, %v54
    %vm70 = vcmp.eq.s32.totalorder %v66, %v54
    %v71 = vsel %vm67, 1, 0
    %v72 = vsel %vm68, 1, 0
    %v73 = vsel %vm69, 1, 0
    %v74 = vsel %vm70, 1, 0
    %v75 = vcvt.s32.f32 %v71
    %v76 = vcvt.s32.f32 %v72
    %v77 = vcvt.s32.f32 %v73
    %v78 = vcvt.s32.f32 %v74
    %v79 = vld [vmem:[%s4] sm:$0xff]
    %v80 = vld [vmem:[%s4 + $0x8] sm:$0xff]
    %v81 = vld [vmem:[%s4 + $0x10] sm:$0xff]
    %v82 = vld [vmem:[%s4 + $0x18] sm:$0xff]
    %vm83 = vcmask 261120
    %v85 = vsel %vm83, %v75, 0
    %v88 = vsel %vm83, %v76, 0
    %v91 = vsel %vm83, %v77, 0
    %v94 = vsel %vm83, %v78, 0
    %96 = vmatprep.subr.mxu0 0.0
    %97 = vmatpush1.msra.mxu0 %v79
    %98 = vmatprep.subr.mxu0 0.0
    %99 = vmatpush1.msra.mxu0 %v80
    %100 = vmatprep.subr.mxu0 0.0
    %101 = vmatpush1.msra.mxu0 %v81
    %102 = vmatprep.subr.mxu0 0.0
    %103 = vmatpush1.msra.mxu0 %v82
    %104 = vmatprep.subr.mxu0 0.0
    %105 = vmatpush1.msra.mxu0 0.0
    %106 = vmatprep.subr.mxu0 0.0
    %107 = vmatpush1.msra.mxu0 0.0
    %108 = vmatprep.subr.mxu0 0.0
    %109 = vmatpush1.msra.mxu0 0.0
    %110 = vmatprep.subr.mxu0 0.0
    %111 = vmatpush1.msra.mxu0 0.0
    %112 = vmatprep.subr.mxu0 0.0
    %113 = vmatpush1.msra.mxu0 0.0
    %114 = vmatprep.subr.mxu0 0.0
    %115 = vmatpush1.msra.mxu0 0.0
    %116 = vmatprep.subr.mxu0 0.0
    %117 = vmatpush1.msra.mxu0 0.0
    %118 = vmatprep.subr.mxu0 0.0
    %119 = vmatpush1.msra.mxu0 0.0
    %120 = vmatprep.subr.mxu0 0.0
    %121 = vmatpush1.msra.mxu0 0.0
    %122 = vmatprep.subr.mxu0 0.0
    %123 = vmatpush1.msra.mxu0 0.0
    %124 = vmatprep.subr.mxu0 0.0
    %125 = vmatpush1.msra.mxu0 0.0
    %126 = vmatprep.subr.mxu0 0.0
    %127 = vmatpush1.msra.mxu0 0.0
    %128 = vmatprep.subr.mxu0 0.0
    %129 = vmatpush1.msra.mxu0 0.0
    %130 = vmatprep.subr.mxu0 0.0
    %131 = vmatpush1.msra.mxu0 0.0
    %132 = vmatprep.subr.mxu0 0.0
    %133 = vmatpush1.msra.mxu0 0.0
    %134 = vmatprep.subr.mxu0 0.0
    %135 = vmatpush1.msra.mxu0 0.0
    %136 = vmatprep.subr.mxu0 0.0
    %137 = vmatpush1.msra.mxu0 0.0
    %138 = vmatprep.subr.mxu0 0.0
    %139 = vmatpush1.msra.mxu0 0.0
    %140 = vmatprep.subr.mxu0 0.0
    %141 = vmatpush1.msra.mxu0 0.0
    %142 = vmatprep.subr.mxu0 0.0
    %143 = vmatpush1.msra.mxu0 0.0
    %144 = vmatprep.subr.mxu0 0.0
    %145 = vmatpush1.msra.mxu0 0.0
    %146 = vmatprep.subr.mxu0 0.0
    %147 = vmatpush1.msra.mxu0 0.0
    %148 = vmatprep.subr.mxu0 0.0
    %149 = vmatpush1.msra.mxu0 0.0
    %150 = vmatprep.subr.mxu0 0.0
    %151 = vmatpush1.msra.mxu0 0.0
    %152 = vmatprep.subr.mxu0 0.0
    %153 = vmatpush1.msra.mxu0 0.0
    %154 = vmatprep.subr.mxu0 0.0
    %155 = vmatpush1.msra.mxu0 0.0
    %156 = vmatprep.subr.mxu0 0.0
    %157 = vmatpush1.msra.mxu0 0.0
    %158 = vmatprep.subr.mxu0 0.0
    %159 = vmatpush1.msra.mxu0 0.0
    %160 = vmatprep.mubr.f32.mxu0 0.0
    %161 = vmatmul.mubr.f32.gmra.mrb[0].mxu0 %v85
    %v162 = vpop.f32.mrb[0].mxu0
    %v163 = vadd.f32 0.0, %v162
    %v164 = vpop.f32.mrb[0].mxu0
    %165 = vmatprep.mubr.f32.mxu0 0.0
    %166 = vmatmul.mubr.f32.gmra.mrb[0].mxu0 %v88
    %v167 = vpop.f32.mrb[0].mxu0
    %v168 = vadd.f32 0.0, %v167
    %v169 = vpop.f32.mrb[0].mxu0
    %170 = vmatprep.mubr.f32.mxu0 0.0
    %171 = vmatmul.mubr.f32.gmra.mrb[0].mxu0 %v91
    %v172 = vpop.f32.mrb[0].mxu0
    %v173 = vadd.f32 0.0, %v172
    %v174 = vpop.f32.mrb[0].mxu0
    %175 = vmatprep.mubr.f32.mxu0 0.0
    %176 = vmatmul.mubr.f32.gmra.mrb[0].mxu0 %v94
    %v177 = vpop.f32.mrb[0].mxu0
    %v178 = vadd.f32 0.0, %v177
    %v179 = vpop.f32.mrb[0].mxu0
    %180 = vdwg.mxu0
    %v181 = vld [vmem:[%s1] sm:$0xff]
    %v182 = vld [vmem:[%s1 + $0x8] sm:$0xff]
    %v183 = vld [vmem:[%s1 + $0x10] sm:$0xff]
    %v184 = vld [vmem:[%s1 + $0x18] sm:$0xff]
    %v185 = vld [vmem:[%s1 + $0x20] sm:$0xff]
    %v186 = vld [vmem:[%s1 + $0x28] sm:$0xff]
    %v187 = vld [vmem:[%s1 + $0x30] sm:$0xff]
    %v188 = vld [vmem:[%s1 + $0x38] sm:$0xff]
    %v189 = vld [vmem:[%s1 + $0x40] sm:$0xff]
    %v190 = vld [vmem:[%s1 + $0x48] sm:$0xff]
    %v191 = vld [vmem:[%s1 + $0x50] sm:$0xff]
    %v192 = vld [vmem:[%s1 + $0x58] sm:$0xff]
    %193 = vset.pattern.permute.xlu0 0
    %194 = vperm.xlu0 %193, %v181
    %v195 = vpop.permute.xlu0 %194
    %196 = vset.pattern.permute.xlu0 0
    %197 = vperm.xlu0 %196, %v182
    %v198 = vpop.permute.xlu0 %197
    %199 = vset.pattern.permute.xlu0 0
    %200 = vperm.xlu0 %199, %v183
    %v201 = vpop.permute.xlu0 %200
    %202 = vset.pattern.permute.xlu0 0
    %203 = vperm.xlu0 %202, %v184
    %v204 = vpop.permute.xlu0 %203
    %205 = vset.pattern.permute.xlu0 0
    %206 = vperm.xlu0 %205, %v185
    %v207 = vpop.permute.xlu0 %206
    %208 = vset.pattern.permute.xlu0 0
    %209 = vperm.xlu0 %208, %v186
    %v210 = vpop.permute.xlu0 %209
    %211 = vset.pattern.permute.xlu0 0
    %212 = vperm.xlu0 %211, %v187
    %v213 = vpop.permute.xlu0 %212
    %214 = vset.pattern.permute.xlu0 0
    %215 = vperm.xlu0 %214, %v188
    %v216 = vpop.permute.xlu0 %215
    %217 = vset.pattern.permute.xlu0 0
    %218 = vperm.xlu0 %217, %v189
    %v219 = vpop.permute.xlu0 %218
    %220 = vset.pattern.permute.xlu0 0
    %221 = vperm.xlu0 %220, %v190
    %v222 = vpop.permute.xlu0 %221
    %223 = vset.pattern.permute.xlu0 0
    %224 = vperm.xlu0 %223, %v191
    %v225 = vpop.permute.xlu0 %224
    %226 = vset.pattern.permute.xlu0 0
    %227 = vperm.xlu0 %226, %v192
    %v228 = vpop.permute.xlu0 %227
    %vm229 = vcmp.eq.s32.totalorder %v195, %v54
    %vm230 = vcmp.eq.s32.totalorder %v198, %v54
    %vm231 = vcmp.eq.s32.totalorder %v201, %v54
    %vm232 = vcmp.eq.s32.totalorder %v204, %v54
    %vm233 = vcmp.eq.s32.totalorder %v207, %v54
    %vm234 = vcmp.eq.s32.totalorder %v210, %v54
    %vm235 = vcmp.eq.s32.totalorder %v213, %v54
    %vm236 = vcmp.eq.s32.totalorder %v216, %v54
    %vm237 = vcmp.eq.s32.totalorder %v219, %v54
    %vm238 = vcmp.eq.s32.totalorder %v222, %v54
    %vm239 = vcmp.eq.s32.totalorder %v225, %v54
    %vm240 = vcmp.eq.s32.totalorder %v228, %v54
    %v241 = vsel %vm229, 1, 0
    %v242 = vsel %vm230, 1, 0
    %v243 = vsel %vm231, 1, 0
    %v244 = vsel %vm232, 1, 0
    %v245 = vsel %vm233, 1, 0
    %v246 = vsel %vm234, 1, 0
    %v247 = vsel %vm235, 1, 0
    %v248 = vsel %vm236, 1, 0
    %v249 = vsel %vm237, 1, 0
    %v250 = vsel %vm238, 1, 0
    %v251 = vsel %vm239, 1, 0
    %v252 = vsel %vm240, 1, 0
    %v253 = vcvt.s32.f32 %v241
    %v254 = vcvt.s32.f32 %v242
    %v255 = vcvt.s32.f32 %v243
    %v256 = vcvt.s32.f32 %v244
    %v257 = vcvt.s32.f32 %v245
    %v258 = vcvt.s32.f32 %v246
    %v259 = vcvt.s32.f32 %v247
    %v260 = vcvt.s32.f32 %v248
    %v261 = vcvt.s32.f32 %v249
    %v262 = vcvt.s32.f32 %v250
    %v263 = vcvt.s32.f32 %v251
    %v264 = vcvt.s32.f32 %v252
    %v265 = vld [vmem:[%s5] sm:$0xff]
    %v266 = vld [vmem:[%s5 + $0x8] sm:$0xff]
    %v267 = vld [vmem:[%s5 + $0x10] sm:$0xff]
    %v268 = vld [vmem:[%s5 + $0x18] sm:$0xff]
    %v269 = vld [vmem:[%s5 + $0x20] sm:$0xff]
    %v270 = vld [vmem:[%s5 + $0x28] sm:$0xff]
    %v271 = vld [vmem:[%s5 + $0x30] sm:$0xff]
    %v272 = vld [vmem:[%s5 + $0x38] sm:$0xff]
    %vm273 = vcmask 523264
    %v275 = vsel %vm273, %v253, 0
    %v278 = vsel %vm273, %v254, 0
    %v281 = vsel %vm273, %v255, 0
    %v284 = vsel %vm273, %v256, 0
    %v287 = vsel %vm273, %v257, 0
    %v290 = vsel %vm273, %v258, 0
    %v293 = vsel %vm273, %v259, 0
    %v296 = vsel %vm273, %v260, 0
    %v299 = vsel %vm273, %v261, 0
    %v302 = vsel %vm273, %v262, 0
    %v305 = vsel %vm273, %v263, 0
    %v308 = vsel %vm273, %v264, 0
    %310 = vmatprep.subr.mxu0 0.0
    %311 = vmatpush1.msra.mxu0 %v265
    %312 = vmatprep.subr.mxu0 0.0
    %313 = vmatpush1.msra.mxu0 %v266
    %314 = vmatprep.subr.mxu0 0.0
    %315 = vmatpush1.msra.mxu0 %v267
    %316 = vmatprep.subr.mxu0 0.0
    %317 = vmatpush1.msra.mxu0 %v268
    %318 = vmatprep.subr.mxu0 0.0
    %319 = vmatpush1.msra.mxu0 %v269
    %320 = vmatprep.subr.mxu0 0.0
    %321 = vmatpush1.msra.mxu0 %v270
    %322 = vmatprep.subr.mxu0 0.0
    %323 = vmatpush1.msra.mxu0 %v271
    %324 = vmatprep.subr.mxu0 0.0
    %325 = vmatpush1.msra.mxu0 %v272
    %326 = vmatprep.subr.mxu0 0.0
    %327 = vmatpush1.msra.mxu0 0.0
    %328 = vmatprep.subr.mxu0 0.0
    %329 = vmatpush1.msra.mxu0 0.0
    %330 = vmatprep.subr.mxu0 0.0
    %331 = vmatpush1.msra.mxu0 0.0
    %332 = vmatprep.subr.mxu0 0.0
    %333 = vmatpush1.msra.mxu0 0.0
    %334 = vmatprep.subr.mxu0 0.0
    %335 = vmatpush1.msra.mxu0 0.0
    %336 = vmatprep.subr.mxu0 0.0
    %337 = vmatpush1.msra.mxu0 0.0
    %338 = vmatprep.subr.mxu0 0.0
    %339 = vmatpush1.msra.mxu0 0.0
    %340 = vmatprep.subr.mxu0 0.0
    %341 = vmatpush1.msra.mxu0 0.0
    %342 = vmatprep.subr.mxu0 0.0
    %343 = vmatpush1.msra.mxu0 0.0
    %344 = vmatprep.subr.mxu0 0.0
    %345 = vmatpush1.msra.mxu0 0.0
    %346 = vmatprep.subr.mxu0 0.0
    %347 = vmatpush1.msra.mxu0 0.0
    %348 = vmatprep.subr.mxu0 0.0
    %349 = vmatpush1.msra.mxu0 0.0
    %350 = vmatprep.subr.mxu0 0.0
    %351 = vmatpush1.msra.mxu0 0.0
    %352 = vmatprep.subr.mxu0 0.0
    %353 = vmatpush1.msra.mxu0 0.0
    %354 = vmatprep.subr.mxu0 0.0
    %355 = vmatpush1.msra.mxu0 0.0
    %356 = vmatprep.subr.mxu0 0.0
    %357 = vmatpush1.msra.mxu0 0.0
    %358 = vmatprep.subr.mxu0 0.0
    %359 = vmatpush1.msra.mxu0 0.0
    %360 = vmatprep.subr.mxu0 0.0
    %361 = vmatpush1.msra.mxu0 0.0
    %362 = vmatprep.subr.mxu0 0.0
    %363 = vmatpush1.msra.mxu0 0.0
    %364 = vmatprep.subr.mxu0 0.0
    %365 = vmatpush1.msra.mxu0 0.0
    %366 = vmatprep.subr.mxu0 0.0
    %367 = vmatpush1.msra.mxu0 0.0
    %368 = vmatprep.subr.mxu0 0.0
    %369 = vmatpush1.msra.mxu0 0.0
    %370 = vmatprep.subr.mxu0 0.0
    %371 = vmatpush1.msra.mxu0 0.0
    %372 = vmatprep.subr.mxu0 0.0
    %373 = vmatpush1.msra.mxu0 0.0
    %374 = vmatprep.mubr.f32.mxu0 0.0
    %375 = vmatmul.mubr.f32.gmra.mrb[0].mxu0 %v275
    %v376 = vpop.f32.mrb[0].mxu0
    %v377 = vadd.f32 0.0, %v376
    %v378 = vpop.f32.mrb[0].mxu0
    %379 = vmatprep.mubr.f32.mxu0 0.0
    %380 = vmatmul.mubr.f32.gmra.mrb[0].mxu0 %v278
    %v381 = vpop.f32.mrb[0].mxu0
    %v382 = vadd.f32 0.0, %v381
    %v383 = vpop.f32.mrb[0].mxu0
    %384 = vmatprep.mubr.f32.mxu0 0.0
    %385 = vmatmul.mubr.f32.gmra.mrb[0].mxu0 %v281
    %v386 = vpop.f32.mrb[0].mxu0
    %v387 = vadd.f32 0.0, %v386
    %v388 = vpop.f32.mrb[0].mxu0
    %389 = vmatprep.mubr.f32.mxu0 0.0
    %390 = vmatmul.mubr.f32.gmra.mrb[0].mxu0 %v284
    %v391 = vpop.f32.mrb[0].mxu0
    %v392 = vadd.f32 0.0, %v391
    %v393 = vpop.f32.mrb[0].mxu0
    %394 = vmatprep.mubr.f32.mxu0 0.0
    %395 = vmatmul.mubr.f32.gmra.mrb[0].mxu0 %v287
    %v396 = vpop.f32.mrb[0].mxu0
    %v397 = vadd.f32 0.0, %v396
    %v398 = vpop.f32.mrb[0].mxu0
    %399 = vmatprep.mubr.f32.mxu0 0.0
    %400 = vmatmul.mubr.f32.gmra.mrb[0].mxu0 %v290
    %v401 = vpop.f32.mrb[0].mxu0
    %v402 = vadd.f32 0.0, %v401
    %v403 = vpop.f32.mrb[0].mxu0
    %404 = vmatprep.mubr.f32.mxu0 0.0
    %405 = vmatmul.mubr.f32.gmra.mrb[0].mxu0 %v293
    %v406 = vpop.f32.mrb[0].mxu0
    %v407 = vadd.f32 0.0, %v406
    %v408 = vpop.f32.mrb[0].mxu0
    %409 = vmatprep.mubr.f32.mxu0 0.0
    %410 = vmatmul.mubr.f32.gmra.mrb[0].mxu0 %v296
    %v411 = vpop.f32.mrb[0].mxu0
    %v412 = vadd.f32 0.0, %v411
    %v413 = vpop.f32.mrb[0].mxu0
    %414 = vmatprep.mubr.f32.mxu0 0.0
    %415 = vmatmul.mubr.f32.gmra.mrb[0].mxu0 %v299
    %v416 = vpop.f32.mrb[0].mxu0
    %v417 = vadd.f32 0.0, %v416
    %v418 = vpop.f32.mrb[0].mxu0
    %419 = vmatprep.mubr.f32.mxu0 0.0
    %420 = vmatmul.mubr.f32.gmra.mrb[0].mxu0 %v302
    %v421 = vpop.f32.mrb[0].mxu0
    %v422 = vadd.f32 0.0, %v421
    %v423 = vpop.f32.mrb[0].mxu0
    %424 = vmatprep.mubr.f32.mxu0 0.0
    %425 = vmatmul.mubr.f32.gmra.mrb[0].mxu0 %v305
    %v426 = vpop.f32.mrb[0].mxu0
    %v427 = vadd.f32 0.0, %v426
    %v428 = vpop.f32.mrb[0].mxu0
    %429 = vmatprep.mubr.f32.mxu0 0.0
    %430 = vmatmul.mubr.f32.gmra.mrb[0].mxu0 %v308
    %v431 = vpop.f32.mrb[0].mxu0
    %v432 = vadd.f32 0.0, %v431
    %v433 = vpop.f32.mrb[0].mxu0
    %434 = vdwg.mxu0
    %v435 = vld [vmem:[%s2] sm:$0xff]
    %v436 = vld [vmem:[%s2 + $0x8] sm:$0xff]
    %v437 = vld [vmem:[%s2 + $0x10] sm:$0xff]
    %v438 = vld [vmem:[%s2 + $0x18] sm:$0xff]
    %439 = vset.pattern.permute.xlu0 0
    %440 = vperm.xlu0 %439, %v435
    %v441 = vpop.permute.xlu0 %440
    %442 = vset.pattern.permute.xlu0 0
    %443 = vperm.xlu0 %442, %v436
    %v444 = vpop.permute.xlu0 %443
    %445 = vset.pattern.permute.xlu0 0
    %446 = vperm.xlu0 %445, %v437
    %v447 = vpop.permute.xlu0 %446
    %448 = vset.pattern.permute.xlu0 0
    %449 = vperm.xlu0 %448, %v438
    %v450 = vpop.permute.xlu0 %449
    %vm451 = vcmp.eq.s32.totalorder %v441, %v54
    %vm452 = vcmp.eq.s32.totalorder %v444, %v54
    %vm453 = vcmp.eq.s32.totalorder %v447, %v54
    %vm454 = vcmp.eq.s32.totalorder %v450, %v54
    %v455 = vsel %vm451, 1, 0
    %v456 = vsel %vm452, 1, 0
    %v457 = vsel %vm453, 1, 0
    %v458 = vsel %vm454, 1, 0
    %v459 = vcvt.s32.f32 %v455
    %v460 = vcvt.s32.f32 %v456
    %v461 = vcvt.s32.f32 %v457
    %v462 = vcvt.s32.f32 %v458
    %v463 = vadd.f32 %v459, 0.0
    %v464 = vadd.f32 %v460, 0.0
    %v465 = vadd.f32 %v461, 0.0
    %v466 = vadd.f32 %v462, 0.0
    %467 = vset.pattern.permute.xlu0 1
    %468 = vperm.xlu0 %467, %v435
    %v469 = vpop.permute.xlu0 %468
    %470 = vset.pattern.permute.xlu0 1
    %471 = vperm.xlu0 %470, %v436
    %v472 = vpop.permute.xlu0 %471
    %473 = vset.pattern.permute.xlu0 1
    %474 = vperm.xlu0 %473, %v437
    %v475 = vpop.permute.xlu0 %474
    %476 = vset.pattern.permute.xlu0 1
    %477 = vperm.xlu0 %476, %v438
    %v478 = vpop.permute.xlu0 %477
    %vm479 = vcmp.eq.s32.totalorder %v469, %v54
    %vm480 = vcmp.eq.s32.totalorder %v472, %v54
    %vm481 = vcmp.eq.s32.totalorder %v475, %v54
    %vm482 = vcmp.eq.s32.totalorder %v478, %v54
    %v483 = vsel %vm479, 1, 0
    %v484 = vsel %vm480, 1, 0
    %v485 = vsel %vm481, 1, 0
    %v486 = vsel %vm482, 1, 0
    %v487 = vcvt.s32.f32 %v483
    %v488 = vcvt.s32.f32 %v484
    %v489 = vcvt.s32.f32 %v485
    %v490 = vcvt.s32.f32 %v486
    %v491 = vadd.f32 %v463, %v487
    %v492 = vadd.f32 %v464, %v488
    %v493 = vadd.f32 %v465, %v489
    %v494 = vadd.f32 %v466, %v490
    %495 = vset.pattern.permute.xlu0 2
    %496 = vperm.xlu0 %495, %v435
    %v497 = vpop.permute.xlu0 %496
    %498 = vset.pattern.permute.xlu0 2
    %499 = vperm.xlu0 %498, %v436
    %v500 = vpop.permute.xlu0 %499
    %501 = vset.pattern.permute.xlu0 2
    %502 = vperm.xlu0 %501, %v437
    %v503 = vpop.permute.xlu0 %502
    %504 = vset.pattern.permute.xlu0 2
    %505 = vperm.xlu0 %504, %v438
    %v506 = vpop.permute.xlu0 %505
    %vm507 = vcmp.eq.s32.totalorder %v497, %v54
    %vm508 = vcmp.eq.s32.totalorder %v500, %v54
    %vm509 = vcmp.eq.s32.totalorder %v503, %v54
    %vm510 = vcmp.eq.s32.totalorder %v506, %v54
    %v511 = vsel %vm507, 1, 0
    %v512 = vsel %vm508, 1, 0
    %v513 = vsel %vm509, 1, 0
    %v514 = vsel %vm510, 1, 0
    %v515 = vcvt.s32.f32 %v511
    %v516 = vcvt.s32.f32 %v512
    %v517 = vcvt.s32.f32 %v513
    %v518 = vcvt.s32.f32 %v514
    %v519 = vadd.f32 %v491, %v515
    %v520 = vadd.f32 %v492, %v516
    %v521 = vadd.f32 %v493, %v517
    %v522 = vadd.f32 %v494, %v518
    %523 = vset.pattern.permute.xlu0 3
    %524 = vperm.xlu0 %523, %v435
    %v525 = vpop.permute.xlu0 %524
    %526 = vset.pattern.permute.xlu0 3
    %527 = vperm.xlu0 %526, %v436
    %v528 = vpop.permute.xlu0 %527
    %529 = vset.pattern.permute.xlu0 3
    %530 = vperm.xlu0 %529, %v437
    %v531 = vpop.permute.xlu0 %530
    %532 = vset.pattern.permute.xlu0 3
    %533 = vperm.xlu0 %532, %v438
    %v534 = vpop.permute.xlu0 %533
    %vm535 = vcmp.eq.s32.totalorder %v525, %v54
    %vm536 = vcmp.eq.s32.totalorder %v528, %v54
    %vm537 = vcmp.eq.s32.totalorder %v531, %v54
    %vm538 = vcmp.eq.s32.totalorder %v534, %v54
    %v539 = vsel %vm535, 1, 0
    %v540 = vsel %vm536, 1, 0
    %v541 = vsel %vm537, 1, 0
    %v542 = vsel %vm538, 1, 0
    %v543 = vcvt.s32.f32 %v539
    %v544 = vcvt.s32.f32 %v540
    %v545 = vcvt.s32.f32 %v541
    %v546 = vcvt.s32.f32 %v542
    %v547 = vadd.f32 %v519, %v543
    %v548 = vadd.f32 %v520, %v544
    %v549 = vadd.f32 %v521, %v545
    %v550 = vadd.f32 %v522, %v546
    %v551 = vld [vmem:[%s6] sm:$0xff]
    %v552 = vld [vmem:[%s6 + $0x8] sm:$0xff]
    %vm553 = vcmask 130048
    %v555 = vsel %vm553, %v547, 0
    %v558 = vsel %vm553, %v548, 0
    %v561 = vsel %vm553, %v549, 0
    %v564 = vsel %vm553, %v550, 0
    %566 = vmatprep.subr.mxu0 0.0
    %567 = vmatpush1.msra.mxu0 %v551
    %568 = vmatprep.subr.mxu0 0.0
    %569 = vmatpush1.msra.mxu0 %v552
    %570 = vmatprep.subr.mxu0 0.0
    %571 = vmatpush1.msra.mxu0 0.0
    %572 = vmatprep.subr.mxu0 0.0
    %573 = vmatpush1.msra.mxu0 0.0
    %574 = vmatprep.subr.mxu0 0.0
    %575 = vmatpush1.msra.mxu0 0.0
    %576 = vmatprep.subr.mxu0 0.0
    %577 = vmatpush1.msra.mxu0 0.0
    %578 = vmatprep.subr.mxu0 0.0
    %579 = vmatpush1.msra.mxu0 0.0
    %580 = vmatprep.subr.mxu0 0.0
    %581 = vmatpush1.msra.mxu0 0.0
    %582 = vmatprep.subr.mxu0 0.0
    %583 = vmatpush1.msra.mxu0 0.0
    %584 = vmatprep.subr.mxu0 0.0
    %585 = vmatpush1.msra.mxu0 0.0
    %586 = vmatprep.subr.mxu0 0.0
    %587 = vmatpush1.msra.mxu0 0.0
    %588 = vmatprep.subr.mxu0 0.0
    %589 = vmatpush1.msra.mxu0 0.0
    %590 = vmatprep.subr.mxu0 0.0
    %591 = vmatpush1.msra.mxu0 0.0
    %592 = vmatprep.subr.mxu0 0.0
    %593 = vmatpush1.msra.mxu0 0.0
    %594 = vmatprep.subr.mxu0 0.0
    %595 = vmatpush1.msra.mxu0 0.0
    %596 = vmatprep.subr.mxu0 0.0
    %597 = vmatpush1.msra.mxu0 0.0
    %598 = vmatprep.subr.mxu0 0.0
    %599 = vmatpush1.msra.mxu0 0.0
    %600 = vmatprep.subr.mxu0 0.0
    %601 = vmatpush1.msra.mxu0 0.0
    %602 = vmatprep.subr.mxu0 0.0
    %603 = vmatpush1.msra.mxu0 0.0
    %604 = vmatprep.subr.mxu0 0.0
    %605 = vmatpush1.msra.mxu0 0.0
    %606 = vmatprep.subr.mxu0 0.0
    %607 = vmatpush1.msra.mxu0 0.0
    %608 = vmatprep.subr.mxu0 0.0
    %609 = vmatpush1.msra.mxu0 0.0
    %610 = vmatprep.subr.mxu0 0.0
    %611 = vmatpush1.msra.mxu0 0.0
    %612 = vmatprep.subr.mxu0 0.0
    %613 = vmatpush1.msra.mxu0 0.0
    %614 = vmatprep.subr.mxu0 0.0
    %615 = vmatpush1.msra.mxu0 0.0
    %616 = vmatprep.subr.mxu0 0.0
    %617 = vmatpush1.msra.mxu0 0.0
    %618 = vmatprep.subr.mxu0 0.0
    %619 = vmatpush1.msra.mxu0 0.0
    %620 = vmatprep.subr.mxu0 0.0
    %621 = vmatpush1.msra.mxu0 0.0
    %622 = vmatprep.subr.mxu0 0.0
    %623 = vmatpush1.msra.mxu0 0.0
    %624 = vmatprep.subr.mxu0 0.0
    %625 = vmatpush1.msra.mxu0 0.0
    %626 = vmatprep.subr.mxu0 0.0
    %627 = vmatpush1.msra.mxu0 0.0
    %628 = vmatprep.subr.mxu0 0.0
    %629 = vmatpush1.msra.mxu0 0.0
    %630 = vmatprep.mubr.f32.mxu0 0.0
    %631 = vmatmul.mubr.f32.gmra.mrb[0].mxu0 %v555
    %v632 = vpop.f32.mrb[0].mxu0
    %v633 = vadd.f32 0.0, %v632
    %v634 = vpop.f32.mrb[0].mxu0
    %635 = vmatprep.mubr.f32.mxu0 0.0
    %636 = vmatmul.mubr.f32.gmra.mrb[0].mxu0 %v558
    %v637 = vpop.f32.mrb[0].mxu0
    %v638 = vadd.f32 0.0, %v637
    %v639 = vpop.f32.mrb[0].mxu0
    %640 = vmatprep.mubr.f32.mxu0 0.0
    %641 = vmatmul.mubr.f32.gmra.mrb[0].mxu0 %v561
    %v642 = vpop.f32.mrb[0].mxu0
    %v643 = vadd.f32 0.0, %v642
    %v644 = vpop.f32.mrb[0].mxu0
    %645 = vmatprep.mubr.f32.mxu0 0.0
    %646 = vmatmul.mubr.f32.gmra.mrb[0].mxu0 %v564
    %v647 = vpop.f32.mrb[0].mxu0
    %v648 = vadd.f32 0.0, %v647
    %v649 = vpop.f32.mrb[0].mxu0
    %650 = vdwg.mxu0
    %v651 = vld [vmem:[%s3] sm:$0xff]
    %v652 = vld [vmem:[%s3 + $0x8] sm:$0xff]
    %v653 = vld [vmem:[%s3 + $0x10] sm:$0xff]
    %v654 = vld [vmem:[%s3 + $0x18] sm:$0xff]
    %656 = vset.pattern.permute.xlu0 0
    %657 = vperm.xlu0 %656, %v651
    %v658 = vpop.permute.xlu0 %657
    %661 = vset.pattern.permute.xlu0 0
    %662 = vperm.xlu0 %661, %v652
    %v663 = vpop.permute.xlu0 %662
    %666 = vset.pattern.permute.xlu0 0
    %667 = vperm.xlu0 %666, %v653
    %v668 = vpop.permute.xlu0 %667
    %671 = vset.pattern.permute.xlu0 0
    %672 = vperm.xlu0 %671, %v654
    %v673 = vpop.permute.xlu0 %672
    %v675 = vmul.f32 %v633, %v658
    %v676 = vmul.f32 %v638, %v663
    %v677 = vmul.f32 %v643, %v668
    %v678 = vmul.f32 %v648, %v673
    %v679 = vld [vmem:[%s7] sm:$0xff]
    %v680 = vld [vmem:[%s7 + $0x8] sm:$0xff]
    %v681 = vld [vmem:[%s7 + $0x10] sm:$0xff]
    %v682 = vld [vmem:[%s7 + $0x18] sm:$0xff]
    %v683 = vld [vmem:[%s7 + $0x40] sm:$0xff]
    %v684 = vld [vmem:[%s7 + $0x48] sm:$0xff]
    %v685 = vld [vmem:[%s7 + $0x50] sm:$0xff]
    %v686 = vld [vmem:[%s7 + $0x58] sm:$0xff]
    %691 = vrot.lane.b32.xlu0 %v675, 32
    %v692 = vpop.permute.xlu0 %691
    %693 = vrot.lane.b32.xlu0 %v676, 32
    %v694 = vpop.permute.xlu0 %693
    %695 = vrot.lane.b32.xlu0 %v677, 32
    %v696 = vpop.permute.xlu0 %695
    %697 = vrot.lane.b32.xlu0 %v678, 32
    %v698 = vpop.permute.xlu0 %697
    %v703 = vsel %vm83, %v163, %v692
    %v704 = vsel %vm83, %v168, %v694
    %v705 = vsel %vm83, %v173, %v696
    %v706 = vsel %vm83, %v178, %v698
    %v707 = vld [vmem:[%s8] sm:$0x1]
    %v709 = vlaneseq
    %v710 = vshrl.u32 %v709, 7
    %v711 = vsub.s32 0, %v710
    %v712 = vrot.slane %v707, %v711
    %v715 = vsel %vm273, %v703, 0
    %v718 = vsel %vm273, %v704, 0
    %v721 = vsel %vm273, %v705, 0
    %v724 = vsel %vm273, %v706, 0
    %726 = vmatprep.subr.mxu0 0.0
    %727 = vmatpush1.msra.mxu0 %v679
    %728 = vmatprep.subr.mxu0 0.0
    %729 = vmatpush1.msra.mxu0 %v680
    %730 = vmatprep.subr.mxu0 0.0
    %731 = vmatpush1.msra.mxu0 %v681
    %732 = vmatprep.subr.mxu0 0.0
    %733 = vmatpush1.msra.mxu0 %v682
    %734 = vmatprep.subr.mxu0 0.0
    %735 = vmatpush1.msra.mxu0 %v683
    %736 = vmatprep.subr.mxu0 0.0
    %737 = vmatpush1.msra.mxu0 %v684
    %738 = vmatprep.subr.mxu0 0.0
    %739 = vmatpush1.msra.mxu0 %v685
    %740 = vmatprep.subr.mxu0 0.0
    %741 = vmatpush1.msra.mxu0 %v686
    %742 = vmatprep.subr.mxu0 0.0
    %743 = vmatpush1.msra.mxu0 0.0
    %744 = vmatprep.subr.mxu0 0.0
    %745 = vmatpush1.msra.mxu0 0.0
    %746 = vmatprep.subr.mxu0 0.0
    %747 = vmatpush1.msra.mxu0 0.0
    %748 = vmatprep.subr.mxu0 0.0
    %749 = vmatpush1.msra.mxu0 0.0
    %750 = vmatprep.subr.mxu0 0.0
    %751 = vmatpush1.msra.mxu0 0.0
    %752 = vmatprep.subr.mxu0 0.0
    %753 = vmatpush1.msra.mxu0 0.0
    %754 = vmatprep.subr.mxu0 0.0
    %755 = vmatpush1.msra.mxu0 0.0
    %756 = vmatprep.subr.mxu0 0.0
    %757 = vmatpush1.msra.mxu0 0.0
    %758 = vmatprep.subr.mxu0 0.0
    %759 = vmatpush1.msra.mxu0 0.0
    %760 = vmatprep.subr.mxu0 0.0
    %761 = vmatpush1.msra.mxu0 0.0
    %762 = vmatprep.subr.mxu0 0.0
    %763 = vmatpush1.msra.mxu0 0.0
    %764 = vmatprep.subr.mxu0 0.0
    %765 = vmatpush1.msra.mxu0 0.0
    %766 = vmatprep.subr.mxu0 0.0
    %767 = vmatpush1.msra.mxu0 0.0
    %768 = vmatprep.subr.mxu0 0.0
    %769 = vmatpush1.msra.mxu0 0.0
    %770 = vmatprep.subr.mxu0 0.0
    %771 = vmatpush1.msra.mxu0 0.0
    %772 = vmatprep.subr.mxu0 0.0
    %773 = vmatpush1.msra.mxu0 0.0
    %774 = vmatprep.subr.mxu0 0.0
    %775 = vmatpush1.msra.mxu0 0.0
    %776 = vmatprep.subr.mxu0 0.0
    %777 = vmatpush1.msra.mxu0 0.0
    %778 = vmatprep.subr.mxu0 0.0
    %779 = vmatpush1.msra.mxu0 0.0
    %780 = vmatprep.subr.mxu0 0.0
    %781 = vmatpush1.msra.mxu0 0.0
    %782 = vmatprep.subr.mxu0 0.0
    %783 = vmatpush1.msra.mxu0 0.0
    %784 = vmatprep.subr.mxu0 0.0
    %785 = vmatpush1.msra.mxu0 0.0
    %786 = vmatprep.subr.mxu0 0.0
    %787 = vmatpush1.msra.mxu0 0.0
    %788 = vmatprep.subr.mxu0 0.0
    %789 = vmatpush1.msra.mxu0 0.0
    %790 = vmatprep.mubr.f32.mxu0 0.0
    %791 = vmatmul.mubr.f32.gmra.mrb[0].mxu0 %v715
    %v792 = vpop.f32.mrb[0].mxu0
    %v793 = vadd.f32 %v712, %v792
    %v794 = vpop.f32.mrb[0].mxu0
    %795 = vmatprep.mubr.f32.mxu0 0.0
    %796 = vmatmul.mubr.f32.gmra.mrb[0].mxu0 %v718
    %v797 = vpop.f32.mrb[0].mxu0
    %v798 = vadd.f32 %v712, %v797
    %v799 = vpop.f32.mrb[0].mxu0
    %800 = vmatprep.mubr.f32.mxu0 0.0
    %801 = vmatmul.mubr.f32.gmra.mrb[0].mxu0 %v721
    %v802 = vpop.f32.mrb[0].mxu0
    %v803 = vadd.f32 %v712, %v802
    %v804 = vpop.f32.mrb[0].mxu0
    %805 = vmatprep.mubr.f32.mxu0 0.0
    %806 = vmatmul.mubr.f32.gmra.mrb[0].mxu0 %v724
    %v807 = vpop.f32.mrb[0].mxu0
    %v808 = vadd.f32 %v712, %v807
    %v809 = vpop.f32.mrb[0].mxu0
    %810 = vdwg.mxu0
    %v811 = vadd.f32 %v163, %v675
    %v812 = vadd.f32 %v168, %v676
    %v813 = vadd.f32 %v173, %v677
    %v814 = vadd.f32 %v178, %v678
    %v815 = vmul.f32 %v163, %v675
    %v816 = vmul.f32 %v168, %v676
    %v817 = vmul.f32 %v173, %v677
    %v818 = vmul.f32 %v178, %v678
    %v819 = vsel %vm83, %v815, 0.0
    %820 = vadd.xlane.f32.xlu0 %v819
    %v821 = vpop.xlane.xlu0 %820
    %v822 = vsel %vm83, %v816, 0.0
    %823 = vadd.xlane.f32.xlu0 %v822
    %v824 = vpop.xlane.xlu0 %823
    %v825 = vsel %vm83, %v817, 0.0
    %826 = vadd.xlane.f32.xlu0 %v825
    %v827 = vpop.xlane.xlu0 %826
    %v828 = vsel %vm83, %v818, 0.0
    %829 = vadd.xlane.f32.xlu0 %v828
    %v830 = vpop.xlane.xlu0 %829
    %v831 = vld [vmem:[%s7 + $0x20] sm:$0xff]
    %v832 = vld [vmem:[%s7 + $0x28] sm:$0xff]
    %v833 = vld [vmem:[%s7 + $0x30] sm:$0xff]
    %v834 = vld [vmem:[%s7 + $0x38] sm:$0xff]
    %v836 = vsel %vm83, %v377, 0
    %v839 = vsel %vm83, %v382, 0
    %v842 = vsel %vm83, %v387, 0
    %v845 = vsel %vm83, %v392, 0
    %v848 = vsel %vm83, %v397, 0
    %v851 = vsel %vm83, %v402, 0
    %v854 = vsel %vm83, %v407, 0
    %v857 = vsel %vm83, %v412, 0
    %v860 = vsel %vm83, %v417, 0
    %v863 = vsel %vm83, %v422, 0
    %v866 = vsel %vm83, %v427, 0
    %v869 = vsel %vm83, %v432, 0
    %871 = vmatprep.subr.mxu0 0.0
    %872 = vmatpush1.msra.mxu0 %v831
    %873 = vmatprep.subr.mxu0 0.0
    %874 = vmatpush1.msra.mxu0 %v832
    %875 = vmatprep.subr.mxu0 0.0
    %876 = vmatpush1.msra.mxu0 %v833
    %877 = vmatprep.subr.mxu0 0.0
    %878 = vmatpush1.msra.mxu0 %v834
    %879 = vmatprep.subr.mxu0 0.0
    %880 = vmatpush1.msra.mxu0 0.0
    %881 = vmatprep.subr.mxu0 0.0
    %882 = vmatpush1.msra.mxu0 0.0
    %883 = vmatprep.subr.mxu0 0.0
    %884 = vmatpush1.msra.mxu0 0.0
    %885 = vmatprep.subr.mxu0 0.0
    %886 = vmatpush1.msra.mxu0 0.0
    %887 = vmatprep.subr.mxu0 0.0
    %888 = vmatpush1.msra.mxu0 0.0
    %889 = vmatprep.subr.mxu0 0.0
    %890 = vmatpush1.msra.mxu0 0.0
    %891 = vmatprep.subr.mxu0 0.0
    %892 = vmatpush1.msra.mxu0 0.0
    %893 = vmatprep.subr.mxu0 0.0
    %894 = vmatpush1.msra.mxu0 0.0
    %895 = vmatprep.subr.mxu0 0.0
    %896 = vmatpush1.msra.mxu0 0.0
    %897 = vmatprep.subr.mxu0 0.0
    %898 = vmatpush1.msra.mxu0 0.0
    %899 = vmatprep.subr.mxu0 0.0
    %900 = vmatpush1.msra.mxu0 0.0
    %901 = vmatprep.subr.mxu0 0.0
    %902 = vmatpush1.msra.mxu0 0.0
    %903 = vmatprep.subr.mxu0 0.0
    %904 = vmatpush1.msra.mxu0 0.0
    %905 = vmatprep.subr.mxu0 0.0
    %906 = vmatpush1.msra.mxu0 0.0
    %907 = vmatprep.subr.mxu0 0.0
    %908 = vmatpush1.msra.mxu0 0.0
    %909 = vmatprep.subr.mxu0 0.0
    %910 = vmatpush1.msra.mxu0 0.0
    %911 = vmatprep.subr.mxu0 0.0
    %912 = vmatpush1.msra.mxu0 0.0
    %913 = vmatprep.subr.mxu0 0.0
    %914 = vmatpush1.msra.mxu0 0.0
    %915 = vmatprep.subr.mxu0 0.0
    %916 = vmatpush1.msra.mxu0 0.0
    %917 = vmatprep.subr.mxu0 0.0
    %918 = vmatpush1.msra.mxu0 0.0
    %919 = vmatprep.subr.mxu0 0.0
    %920 = vmatpush1.msra.mxu0 0.0
    %921 = vmatprep.subr.mxu0 0.0
    %922 = vmatpush1.msra.mxu0 0.0
    %923 = vmatprep.subr.mxu0 0.0
    %924 = vmatpush1.msra.mxu0 0.0
    %925 = vmatprep.subr.mxu0 0.0
    %926 = vmatpush1.msra.mxu0 0.0
    %927 = vmatprep.subr.mxu0 0.0
    %928 = vmatpush1.msra.mxu0 0.0
    %929 = vmatprep.subr.mxu0 0.0
    %930 = vmatpush1.msra.mxu0 0.0
    %931 = vmatprep.subr.mxu0 0.0
    %932 = vmatpush1.msra.mxu0 0.0
    %933 = vmatprep.subr.mxu0 0.0
    %934 = vmatpush1.msra.mxu0 0.0
    %935 = vmatprep.mubr.f32.mxu0 0.0
    %936 = vmatmul.mubr.f32.gmra.mrb[0].mxu0 %v836
    %v937 = vpop.f32.mrb[0].mxu0
    %v938 = vadd.f32 0.0, %v937
    %v939 = vpop.f32.mrb[0].mxu0
    %940 = vmatprep.mubr.f32.mxu0 0.0
    %941 = vmatmul.mubr.f32.gmra.mrb[0].mxu0 %v839
    %v942 = vpop.f32.mrb[0].mxu0
    %v943 = vadd.f32 0.0, %v942
    %v944 = vpop.f32.mrb[0].mxu0
    %945 = vmatprep.mubr.f32.mxu0 0.0
    %946 = vmatmul.mubr.f32.gmra.mrb[0].mxu0 %v842
    %v947 = vpop.f32.mrb[0].mxu0
    %v948 = vadd.f32 0.0, %v947
    %v949 = vpop.f32.mrb[0].mxu0
    %950 = vmatprep.mubr.f32.mxu0 0.0
    %951 = vmatmul.mubr.f32.gmra.mrb[0].mxu0 %v845
    %v952 = vpop.f32.mrb[0].mxu0
    %v953 = vadd.f32 0.0, %v952
    %v954 = vpop.f32.mrb[0].mxu0
    %955 = vmatprep.mubr.f32.mxu0 0.0
    %956 = vmatmul.mubr.f32.gmra.mrb[0].mxu0 %v848
    %v957 = vpop.f32.mrb[0].mxu0
    %v958 = vadd.f32 0.0, %v957
    %v959 = vpop.f32.mrb[0].mxu0
    %960 = vmatprep.mubr.f32.mxu0 0.0
    %961 = vmatmul.mubr.f32.gmra.mrb[0].mxu0 %v851
    %v962 = vpop.f32.mrb[0].mxu0
    %v963 = vadd.f32 0.0, %v962
    %v964 = vpop.f32.mrb[0].mxu0
    %965 = vmatprep.mubr.f32.mxu0 0.0
    %966 = vmatmul.mubr.f32.gmra.mrb[0].mxu0 %v854
    %v967 = vpop.f32.mrb[0].mxu0
    %v968 = vadd.f32 0.0, %v967
    %v969 = vpop.f32.mrb[0].mxu0
    %970 = vmatprep.mubr.f32.mxu0 0.0
    %971 = vmatmul.mubr.f32.gmra.mrb[0].mxu0 %v857
    %v972 = vpop.f32.mrb[0].mxu0
    %v973 = vadd.f32 0.0, %v972
    %v974 = vpop.f32.mrb[0].mxu0
    %975 = vmatprep.mubr.f32.mxu0 0.0
    %976 = vmatmul.mubr.f32.gmra.mrb[0].mxu0 %v860
    %v977 = vpop.f32.mrb[0].mxu0
    %v978 = vadd.f32 0.0, %v977
    %v979 = vpop.f32.mrb[0].mxu0
    %980 = vmatprep.mubr.f32.mxu0 0.0
    %981 = vmatmul.mubr.f32.gmra.mrb[0].mxu0 %v863
    %v982 = vpop.f32.mrb[0].mxu0
    %v983 = vadd.f32 0.0, %v982
    %v984 = vpop.f32.mrb[0].mxu0
    %985 = vmatprep.mubr.f32.mxu0 0.0
    %986 = vmatmul.mubr.f32.gmra.mrb[0].mxu0 %v866
    %v987 = vpop.f32.mrb[0].mxu0
    %v988 = vadd.f32 0.0, %v987
    %v989 = vpop.f32.mrb[0].mxu0
    %990 = vmatprep.mubr.f32.mxu0 0.0
    %991 = vmatmul.mubr.f32.gmra.mrb[0].mxu0 %v869
    %v992 = vpop.f32.mrb[0].mxu0
    %v993 = vadd.f32 0.0, %v992
    %v994 = vpop.f32.mrb[0].mxu0
    %995 = vdwg.mxu0
    %v996 = vadd.f32 %v938, %v793
    %v997 = vadd.f32 %v943, %v798
    %v998 = vadd.f32 %v948, %v803
    %v999 = vadd.f32 %v953, %v808
    %v1000 = vadd.f32 %v958, %v793
    %v1001 = vadd.f32 %v963, %v798
    %v1002 = vadd.f32 %v968, %v803
    %v1003 = vadd.f32 %v973, %v808
    %v1004 = vadd.f32 %v978, %v793
    %v1005 = vadd.f32 %v983, %v798
    %v1006 = vadd.f32 %v988, %v803
    %v1007 = vadd.f32 %v993, %v808
    %v1008 = vmax.f32 %v996, 0.0
    %v1009 = vmax.f32 %v997, 0.0
    %v1010 = vmax.f32 %v998, 0.0
    %v1011 = vmax.f32 %v999, 0.0
    %v1012 = vmax.f32 %v1000, 0.0
    %v1013 = vmax.f32 %v1001, 0.0
    %v1014 = vmax.f32 %v1002, 0.0
    %v1015 = vmax.f32 %v1003, 0.0
    %v1016 = vmax.f32 %v1004, 0.0
    %v1017 = vmax.f32 %v1005, 0.0
    %v1018 = vmax.f32 %v1006, 0.0
    %v1019 = vmax.f32 %v1007, 0.0
    %v1020 = vld [vmem:[%s9] sm:$0xff]
    %v1021 = vld [vmem:[%s9 + $0x8] sm:$0xff]
    %v1022 = vld [vmem:[%s9 + $0x10] sm:$0xff]
    %v1023 = vld [vmem:[%s9 + $0x18] sm:$0xff]
    %v1024 = vld [vmem:[%s10] sm:$0x1]
    %v1026 = vlaneseq
    %v1027 = vshrl.u32 %v1026, 7
    %v1028 = vsub.s32 0, %v1027
    %v1029 = vrot.slane %v1024, %v1028
    %v1032 = vsel %vm83, %v1008, 0
    %v1035 = vsel %vm83, %v1009, 0
    %v1038 = vsel %vm83, %v1010, 0
    %v1041 = vsel %vm83, %v1011, 0
    %v1044 = vsel %vm83, %v1012, 0
    %v1047 = vsel %vm83, %v1013, 0
    %v1050 = vsel %vm83, %v1014, 0
    %v1053 = vsel %vm83, %v1015, 0
    %v1056 = vsel %vm83, %v1016, 0
    %v1059 = vsel %vm83, %v1017, 0
    %v1062 = vsel %vm83, %v1018, 0
    %v1065 = vsel %vm83, %v1019, 0
    %1067 = vmatprep.subr.mxu0 0.0
    %1068 = vmatpush1.msra.mxu0 %v1020
    %1069 = vmatprep.subr.mxu0 0.0
    %1070 = vmatpush1.msra.mxu0 %v1021
    %1071 = vmatprep.subr.mxu0 0.0
    %1072 = vmatpush1.msra.mxu0 %v1022
    %1073 = vmatprep.subr.mxu0 0.0
    %1074 = vmatpush1.msra.mxu0 %v1023
    %1075 = vmatprep.subr.mxu0 0.0
    %1076 = vmatpush1.msra.mxu0 0.0
    %1077 = vmatprep.subr.mxu0 0.0
    %1078 = vmatpush1.msra.mxu0 0.0
    %1079 = vmatprep.subr.mxu0 0.0
    %1080 = vmatpush1.msra.mxu0 0.0
    %1081 = vmatprep.subr.mxu0 0.0
    %1082 = vmatpush1.msra.mxu0 0.0
    %1083 = vmatprep.subr.mxu0 0.0
    %1084 = vmatpush1.msra.mxu0 0.0
    %1085 = vmatprep.subr.mxu0 0.0
    %1086 = vmatpush1.msra.mxu0 0.0
    %1087 = vmatprep.subr.mxu0 0.0
    %1088 = vmatpush1.msra.mxu0 0.0
    %1089 = vmatprep.subr.mxu0 0.0
    %1090 = vmatpush1.msra.mxu0 0.0
    %1091 = vmatprep.subr.mxu0 0.0
    %1092 = vmatpush1.msra.mxu0 0.0
    %1093 = vmatprep.subr.mxu0 0.0
    %1094 = vmatpush1.msra.mxu0 0.0
    %1095 = vmatprep.subr.mxu0 0.0
    %1096 = vmatpush1.msra.mxu0 0.0
    %1097 = vmatprep.subr.mxu0 0.0
    %1098 = vmatpush1.msra.mxu0 0.0
    %1099 = vmatprep.subr.mxu0 0.0
    %1100 = vmatpush1.msra.mxu0 0.0
    %1101 = vmatprep.subr.mxu0 0.0
    %1102 = vmatpush1.msra.mxu0 0.0
    %1103 = vmatprep.subr.mxu0 0.0
    %1104 = vmatpush1.msra.mxu0 0.0
    %1105 = vmatprep.subr.mxu0 0.0
    %1106 = vmatpush1.msra.mxu0 0.0
    %1107 = vmatprep.subr.mxu0 0.0
    %1108 = vmatpush1.msra.mxu0 0.0
    %1109 = vmatprep.subr.mxu0 0.0
    %1110 = vmatpush1.msra.mxu0 0.0
    %1111 = vmatprep.subr.mxu0 0.0
    %1112 = vmatpush1.msra.mxu0 0.0
    %1113 = vmatprep.subr.mxu0 0.0
    %1114 = vmatpush1.msra.mxu0 0.0
    %1115 = vmatprep.subr.mxu0 0.0
    %1116 = vmatpush1.msra.mxu0 0.0
    %1117 = vmatprep.subr.mxu0 0.0
    %1118 = vmatpush1.msra.mxu0 0.0
    %1119 = vmatprep.subr.mxu0 0.0
    %1120 = vmatpush1.msra.mxu0 0.0
    %1121 = vmatprep.subr.mxu0 0.0
    %1122 = vmatpush1.msra.mxu0 0.0
    %1123 = vmatprep.subr.mxu0 0.0
    %1124 = vmatpush1.msra.mxu0 0.0
    %1125 = vmatprep.subr.mxu0 0.0
    %1126 = vmatpush1.msra.mxu0 0.0
    %1127 = vmatprep.subr.mxu0 0.0
    %1128 = vmatpush1.msra.mxu0 0.0
    %1129 = vmatprep.subr.mxu0 0.0
    %1130 = vmatpush1.msra.mxu0 0.0
    %1131 = vmatprep.mubr.f32.mxu0 0.0
    %1132 = vmatmul.mubr.f32.gmra.mrb[0].mxu0 %v1032
    %v1133 = vpop.f32.mrb[0].mxu0
    %v1134 = vadd.f32 %v1029, %v1133
    %v1135 = vpop.f32.mrb[0].mxu0
    %1136 = vmatprep.mubr.f32.mxu0 0.0
    %1137 = vmatmul.mubr.f32.gmra.mrb[0].mxu0 %v1035
    %v1138 = vpop.f32.mrb[0].mxu0
    %v1139 = vadd.f32 %v1029, %v1138
    %v1140 = vpop.f32.mrb[0].mxu0
    %1141 = vmatprep.mubr.f32.mxu0 0.0
    %1142 = vmatmul.mubr.f32.gmra.mrb[0].mxu0 %v1038
    %v1143 = vpop.f32.mrb[0].mxu0
    %v1144 = vadd.f32 %v1029, %v1143
    %v1145 = vpop.f32.mrb[0].mxu0
    %1146 = vmatprep.mubr.f32.mxu0 0.0
    %1147 = vmatmul.mubr.f32.gmra.mrb[0].mxu0 %v1041
    %v1148 = vpop.f32.mrb[0].mxu0
    %v1149 = vadd.f32 %v1029, %v1148
    %v1150 = vpop.f32.mrb[0].mxu0
    %1151 = vmatprep.mubr.f32.mxu0 0.0
    %1152 = vmatmul.mubr.f32.gmra.mrb[0].mxu0 %v1044
    %v1153 = vpop.f32.mrb[0].mxu0
    %v1154 = vadd.f32 %v1029, %v1153
    %v1155 = vpop.f32.mrb[0].mxu0
    %1156 = vmatprep.mubr.f32.mxu0 0.0
    %1157 = vmatmul.mubr.f32.gmra.mrb[0].mxu0 %v1047
    %v1158 = vpop.f32.mrb[0].mxu0
    %v1159 = vadd.f32 %v1029, %v1158
    %v1160 = vpop.f32.mrb[0].mxu0
    %1161 = vmatprep.mubr.f32.mxu0 0.0
    %1162 = vmatmul.mubr.f32.gmra.mrb[0].mxu0 %v1050
    %v1163 = vpop.f32.mrb[0].mxu0
    %v1164 = vadd.f32 %v1029, %v1163
    %v1165 = vpop.f32.mrb[0].mxu0
    %1166 = vmatprep.mubr.f32.mxu0 0.0
    %1167 = vmatmul.mubr.f32.gmra.mrb[0].mxu0 %v1053
    %v1168 = vpop.f32.mrb[0].mxu0
    %v1169 = vadd.f32 %v1029, %v1168
    %v1170 = vpop.f32.mrb[0].mxu0
    %1171 = vmatprep.mubr.f32.mxu0 0.0
    %1172 = vmatmul.mubr.f32.gmra.mrb[0].mxu0 %v1056
    %v1173 = vpop.f32.mrb[0].mxu0
    %v1174 = vadd.f32 %v1029, %v1173
    %v1175 = vpop.f32.mrb[0].mxu0
    %1176 = vmatprep.mubr.f32.mxu0 0.0
    %1177 = vmatmul.mubr.f32.gmra.mrb[0].mxu0 %v1059
    %v1178 = vpop.f32.mrb[0].mxu0
    %v1179 = vadd.f32 %v1029, %v1178
    %v1180 = vpop.f32.mrb[0].mxu0
    %1181 = vmatprep.mubr.f32.mxu0 0.0
    %1182 = vmatmul.mubr.f32.gmra.mrb[0].mxu0 %v1062
    %v1183 = vpop.f32.mrb[0].mxu0
    %v1184 = vadd.f32 %v1029, %v1183
    %v1185 = vpop.f32.mrb[0].mxu0
    %1186 = vmatprep.mubr.f32.mxu0 0.0
    %1187 = vmatmul.mubr.f32.gmra.mrb[0].mxu0 %v1065
    %v1188 = vpop.f32.mrb[0].mxu0
    %v1189 = vadd.f32 %v1029, %v1188
    %v1190 = vpop.f32.mrb[0].mxu0
    %1191 = vdwg.mxu0
    %v1192 = vmax.f32 %v1134, 0.0
    %v1193 = vmax.f32 %v1139, 0.0
    %v1194 = vmax.f32 %v1144, 0.0
    %v1195 = vmax.f32 %v1149, 0.0
    %v1196 = vmax.f32 %v1154, 0.0
    %v1197 = vmax.f32 %v1159, 0.0
    %v1198 = vmax.f32 %v1164, 0.0
    %v1199 = vmax.f32 %v1169, 0.0
    %v1200 = vmax.f32 %v1174, 0.0
    %v1201 = vmax.f32 %v1179, 0.0
    %v1202 = vmax.f32 %v1184, 0.0
    %v1203 = vmax.f32 %v1189, 0.0
    %v1204 = vld [vmem:[%s11] sm:$0x1]
    %v1206 = vlaneseq
    %v1207 = vshrl.u32 %v1206, 7
    %v1208 = vsub.s32 0, %v1207
    %v1209 = vrot.slane %v1204, %v1208
    %v1211 = vmul.f32 %v1192, %v1209
    %v1212 = vmul.f32 %v1193, %v1209
    %v1213 = vmul.f32 %v1194, %v1209
    %v1214 = vmul.f32 %v1195, %v1209
    %v1215 = vmul.f32 %v1196, %v1209
    %v1216 = vmul.f32 %v1197, %v1209
    %v1217 = vmul.f32 %v1198, %v1209
    %v1218 = vmul.f32 %v1199, %v1209
    %v1219 = vmul.f32 %v1200, %v1209
    %v1220 = vmul.f32 %v1201, %v1209
    %v1221 = vmul.f32 %v1202, %v1209
    %v1222 = vmul.f32 %v1203, %v1209
    %v1223 = vsel %vm83, %v1211, 0.0
    %1224 = vadd.xlane.f32.xlu0 %v1223
    %v1225 = vpop.xlane.xlu0 %1224
    %v1226 = vsel %vm83, %v1212, 0.0
    %1227 = vadd.xlane.f32.xlu0 %v1226
    %v1228 = vpop.xlane.xlu0 %1227
    %v1229 = vsel %vm83, %v1213, 0.0
    %1230 = vadd.xlane.f32.xlu0 %v1229
    %v1231 = vpop.xlane.xlu0 %1230
    %v1232 = vsel %vm83, %v1214, 0.0
    %1233 = vadd.xlane.f32.xlu0 %v1232
    %v1234 = vpop.xlane.xlu0 %1233
    %v1235 = vsel %vm83, %v1215, 0.0
    %1236 = vadd.xlane.f32.xlu0 %v1235
    %v1237 = vpop.xlane.xlu0 %1236
    %v1238 = vsel %vm83, %v1216, 0.0
    %1239 = vadd.xlane.f32.xlu0 %v1238
    %v1240 = vpop.xlane.xlu0 %1239
    %v1241 = vsel %vm83, %v1217, 0.0
    %1242 = vadd.xlane.f32.xlu0 %v1241
    %v1243 = vpop.xlane.xlu0 %1242
    %v1244 = vsel %vm83, %v1218, 0.0
    %1245 = vadd.xlane.f32.xlu0 %v1244
    %v1246 = vpop.xlane.xlu0 %1245
    %v1247 = vsel %vm83, %v1219, 0.0
    %1248 = vadd.xlane.f32.xlu0 %v1247
    %v1249 = vpop.xlane.xlu0 %1248
    %v1250 = vsel %vm83, %v1220, 0.0
    %1251 = vadd.xlane.f32.xlu0 %v1250
    %v1252 = vpop.xlane.xlu0 %1251
    %v1253 = vsel %vm83, %v1221, 0.0
    %1254 = vadd.xlane.f32.xlu0 %v1253
    %v1255 = vpop.xlane.xlu0 %1254
    %v1256 = vsel %vm83, %v1222, 0.0
    %1257 = vadd.xlane.f32.xlu0 %v1256
    %v1258 = vpop.xlane.xlu0 %1257
    %v1259 = vld [vmem:[#allocation2] sm:$0x1]
    %v1261 = vlaneseq
    %v1262 = vshrl.u32 %v1261, 7
    %v1263 = vsub.s32 0, %v1262
    %v1264 = vrot.slane %v1259, %v1263
    %v1266 = vadd.f32 %v1225, %v1264
    %v1267 = vadd.f32 %v1228, %v1264
    %v1268 = vadd.f32 %v1231, %v1264
    %v1269 = vadd.f32 %v1234, %v1264
    %v1270 = vadd.f32 %v1237, %v1264
    %v1271 = vadd.f32 %v1240, %v1264
    %v1272 = vadd.f32 %v1243, %v1264
    %v1273 = vadd.f32 %v1246, %v1264
    %v1274 = vadd.f32 %v1249, %v1264
    %v1275 = vadd.f32 %v1252, %v1264
    %v1276 = vadd.f32 %v1255, %v1264
    %v1277 = vadd.f32 %v1258, %v1264
    %v1278 = vmul.f32 %v377, %v811
    %v1279 = vmul.f32 %v382, %v812
    %v1280 = vmul.f32 %v387, %v813
    %v1281 = vmul.f32 %v392, %v814
    %v1282 = vmul.f32 %v397, %v811
    %v1283 = vmul.f32 %v402, %v812
    %v1284 = vmul.f32 %v407, %v813
    %v1285 = vmul.f32 %v412, %v814
    %v1286 = vmul.f32 %v417, %v811
    %v1287 = vmul.f32 %v422, %v812
    %v1288 = vmul.f32 %v427, %v813
    %v1289 = vmul.f32 %v432, %v814
    %v1290 = vsel %vm83, %v1278, 0.0
    %1291 = vadd.xlane.f32.xlu0 %v1290
    %v1292 = vpop.xlane.xlu0 %1291
    %v1293 = vsel %vm83, %v1279, 0.0
    %1294 = vadd.xlane.f32.xlu0 %v1293
    %v1295 = vpop.xlane.xlu0 %1294
    %v1296 = vsel %vm83, %v1280, 0.0
    %1297 = vadd.xlane.f32.xlu0 %v1296
    %v1298 = vpop.xlane.xlu0 %1297
    %v1299 = vsel %vm83, %v1281, 0.0
    %1300 = vadd.xlane.f32.xlu0 %v1299
    %v1301 = vpop.xlane.xlu0 %1300
    %v1302 = vsel %vm83, %v1282, 0.0
    %1303 = vadd.xlane.f32.xlu0 %v1302
    %v1304 = vpop.xlane.xlu0 %1303
    %v1305 = vsel %vm83, %v1283, 0.0
    %1306 = vadd.xlane.f32.xlu0 %v1305
    %v1307 = vpop.xlane.xlu0 %1306
    %v1308 = vsel %vm83, %v1284, 0.0
    %1309 = vadd.xlane.f32.xlu0 %v1308
    %v1310 = vpop.xlane.xlu0 %1309
    %v1311 = vsel %vm83, %v1285, 0.0
    %1312 = vadd.xlane.f32.xlu0 %v1311
    %v1313 = vpop.xlane.xlu0 %1312
    %v1314 = vsel %vm83, %v1286, 0.0
    %1315 = vadd.xlane.f32.xlu0 %v1314
    %v1316 = vpop.xlane.xlu0 %1315
    %v1317 = vsel %vm83, %v1287, 0.0
    %1318 = vadd.xlane.f32.xlu0 %v1317
    %v1319 = vpop.xlane.xlu0 %1318
    %v1320 = vsel %vm83, %v1288, 0.0
    %1321 = vadd.xlane.f32.xlu0 %v1320
    %v1322 = vpop.xlane.xlu0 %1321
    %v1323 = vsel %vm83, %v1289, 0.0
    %1324 = vadd.xlane.f32.xlu0 %v1323
    %v1325 = vpop.xlane.xlu0 %1324
    %v1326 = vadd.f32 %v1292, %v821
    %v1327 = vadd.f32 %v1295, %v824
    %v1328 = vadd.f32 %v1298, %v827
    %v1329 = vadd.f32 %v1301, %v830
    %v1330 = vadd.f32 %v1304, %v821
    %v1331 = vadd.f32 %v1307, %v824
    %v1332 = vadd.f32 %v1310, %v827
    %v1333 = vadd.f32 %v1313, %v830
    %v1334 = vadd.f32 %v1316, %v821
    %v1335 = vadd.f32 %v1319, %v824
    %v1336 = vadd.f32 %v1322, %v827
    %v1337 = vadd.f32 %v1325, %v830
    %v1338 = vadd.f32 %v1326, %v1266
    %v1339 = vadd.f32 %v1327, %v1267
    %v1340 = vadd.f32 %v1328, %v1268
    %v1341 = vadd.f32 %v1329, %v1269
    %v1342 = vadd.f32 %v1330, %v1270
    %v1343 = vadd.f32 %v1331, %v1271
    %v1344 = vadd.f32 %v1332, %v1272
    %v1345 = vadd.f32 %v1333, %v1273
    %v1346 = vadd.f32 %v1334, %v1274
    %v1347 = vadd.f32 %v1335, %v1275
    %v1348 = vadd.f32 %v1336, %v1276
    %v1349 = vadd.f32 %v1337, %v1277
    %vm1350 = vcmask 7168
    %1351 = vst.msk [vmem:[%s13] sm:$0xff] %vm1350, %v1338
    %1352 = vst.msk [vmem:[%s13 + $0x8] sm:$0xff] %vm1350, %v1339
    %1353 = vst.msk [vmem:[%s13 + $0x10] sm:$0xff] %vm1350, %v1340
    %1354 = vst.msk [vmem:[%s13 + $0x18] sm:$0xff] %vm1350, %v1341
    %v1355 = vsub.f32 %v1342, %v1338
    %v1356 = vsub.f32 %v1343, %v1339
    %v1357 = vsub.f32 %v1344, %v1340
    %v1358 = vsub.f32 %v1345, %v1341
    %v1359 = vsub.f32 %v1346, %v1338
    %v1360 = vsub.f32 %v1347, %v1339
    %v1361 = vsub.f32 %v1348, %v1340
    %v1362 = vsub.f32 %v1349, %v1341
    %v1363 = vmax.f32 %v1355, 0.0
    %v1364 = vmax.f32 %v1356, 0.0
    %v1365 = vmax.f32 %v1357, 0.0
    %v1366 = vmax.f32 %v1358, 0.0
    %v1367 = vmax.f32 %v1359, 0.0
    %v1368 = vmax.f32 %v1360, 0.0
    %v1369 = vmax.f32 %v1361, 0.0
    %v1370 = vmax.f32 %v1362, 0.0
    %v1371 = vand.u32 2147483647, %v1355
    %v1372 = vand.u32 2147483647, %v1356
    %v1373 = vand.u32 2147483647, %v1357
    %v1374 = vand.u32 2147483647, %v1358
    %v1375 = vand.u32 2147483647, %v1359
    %v1376 = vand.u32 2147483647, %v1360
    %v1377 = vand.u32 2147483647, %v1361
    %v1378 = vand.u32 2147483647, %v1362
    %v1379 = vsub.f32 0.0, %v1371
    %v1380 = vsub.f32 0.0, %v1372
    %v1381 = vsub.f32 0.0, %v1373
    %v1382 = vsub.f32 0.0, %v1374
    %v1383 = vsub.f32 0.0, %v1375
    %v1384 = vsub.f32 0.0, %v1376
    %v1385 = vsub.f32 0.0, %v1377
    %v1386 = vsub.f32 0.0, %v1378
    %v1387 = vmul.f32 %v1379, 1.442695
    %v1388 = vpow.pop %v1387
    %v1389 = vmul.f32 %v1380, 1.442695
    %v1390 = vpow.pop %v1389
    %v1391 = vmul.f32 %v1381, 1.442695
    %v1392 = vpow.pop %v1391
    %v1393 = vmul.f32 %v1382, 1.442695
    %v1394 = vpow.pop %v1393
    %v1395 = vmul.f32 %v1383, 1.442695
    %v1396 = vpow.pop %v1395
    %v1397 = vmul.f32 %v1384, 1.442695
    %v1398 = vpow.pop %v1397
    %v1399 = vmul.f32 %v1385, 1.442695
    %v1400 = vpow.pop %v1399
    %v1401 = vmul.f32 %v1386, 1.442695
    %v1402 = vpow.pop %v1401
    %v1403 = vadd.f32 %v1388, 1.0
    %v1404 = vadd.f32 %v1390, 1.0
    %v1405 = vadd.f32 %v1392, 1.0
    %v1406 = vadd.f32 %v1394, 1.0
    %v1407 = vadd.f32 %v1396, 1.0
    %v1408 = vadd.f32 %v1398, 1.0
    %v1409 = vadd.f32 %v1400, 1.0
    %v1410 = vadd.f32 %v1402, 1.0
    %v1411 = vlog2.pop %v1403
    %v1412 = vmul.f32 %v1411, 0.6931472
    %v1413 = vlog2.pop %v1404
    %v1414 = vmul.f32 %v1413, 0.6931472
    %v1415 = vlog2.pop %v1405
    %v1416 = vmul.f32 %v1415, 0.6931472
    %v1417 = vlog2.pop %v1406
    %v1418 = vmul.f32 %v1417, 0.6931472
    %v1419 = vlog2.pop %v1407
    %v1420 = vmul.f32 %v1419, 0.6931472
    %v1421 = vlog2.pop %v1408
    %v1422 = vmul.f32 %v1421, 0.6931472
    %v1423 = vlog2.pop %v1409
    %v1424 = vmul.f32 %v1423, 0.6931472
    %v1425 = vlog2.pop %v1410
    %v1426 = vmul.f32 %v1425, 0.6931472
    %v1427 = vadd.f32 %v1363, %v1412
    %v1428 = vadd.f32 %v1364, %v1414
    %v1429 = vadd.f32 %v1365, %v1416
    %v1430 = vadd.f32 %v1366, %v1418
    %v1431 = vadd.f32 %v1367, %v1420
    %v1432 = vadd.f32 %v1368, %v1422
    %v1433 = vadd.f32 %v1369, %v1424
    %v1434 = vadd.f32 %v1370, %v1426
    %v1435 = vsel %vm1350, %v1427, 0.0
    %v1436 = vsel %vm1350, %v1428, 0.0
    %v1437 = vadd.f32 %v1435, %v1436
    %v1438 = vsel %vm1350, %v1429, 0.0
    %v1439 = vadd.f32 %v1437, %v1438
    %v1440 = vsel %vm1350, %v1430, 0.0
    %v1441 = vadd.f32 %v1439, %v1440
    %v1442 = vsel %vm1350, %v1431, 0.0
    %v1443 = vadd.f32 %v1441, %v1442
    %v1444 = vsel %vm1350, %v1432, 0.0
    %v1445 = vadd.f32 %v1443, %v1444
    %v1446 = vsel %vm1350, %v1433, 0.0
    %v1447 = vadd.f32 %v1445, %v1446
    %v1448 = vsel %vm1350, %v1434, 0.0
    %v1449 = vadd.f32 %v1447, %v1448
    %v1450 = vrot.slane %v1449, 4
    %v1451 = vadd.f32 %v1449, %v1450
    %v1452 = vrot.slane %v1451, 2
    %v1453 = vadd.f32 %v1451, %v1452
    %v1454 = vrot.slane %v1453, 1
    %v1455 = vadd.f32 %v1453, %v1454
    %v1456 = vmul.f32 %v1455, 0.015625
    %vm1457 = vcmask 0
    %1458 = vst.msk [vmem:[#allocation3] sm:$0x1] %vm1457, %v1456
    // Predicated region
    $region54: #{deepfm_forward.1} parent=1 // pred_check
      _
    $region55: #{deepfm_forward.1} parent=1 // pred_check_branch
      %1460 = sbr.rel (0) target = $region57
    $region56: #{deepfm_forward.1} parent=1 // pred_region
      _
    $region57: #{deepfm_forward.1} parent=1 // pred_fallthru
      _
    // Predicated region
    $region58: #{deepfm_forward.1} parent=1 // pred_check
      _
    $region59: #{deepfm_forward.1} parent=1 // pred_check_branch
      %1462 = sbr.rel (0) target = $region61
    $region60: #{deepfm_forward.1} parent=1 // pred_region
      %s1464 = ssub.s32 16, 16
      %1465 = vsyncadd [#allocation4], %s1464
      %s1467 = sshll.u32 [#allocation3], 4
      %s1468 = int_to_ptr.vmem [resolvable:$true] %s1467
      %1470 = dma.vmem_to_hbm [thread:$0]  %s1468, 16, %s14, [#allocation4]
    $region61: #{deepfm_forward.1} parent=1 // pred_fallthru
      _
    // Predicated region
    $region62: #{deepfm_forward.1} parent=1 // pred_check
      _
    $region63: #{deepfm_forward.1} parent=1 // pred_check_branch
      %1472 = sbr.rel (0) target = $region65
    $region64: #{deepfm_forward.1} parent=1 // pred_region
      _
    $region65: #{deepfm_forward.1} parent=1 // pred_fallthru
      _
    // Predicated region
    $region66: #{deepfm_forward.1} parent=1 // pred_check
      _
    $region67: #{deepfm_forward.1} parent=1 // pred_check_branch
      %1474 = sbr.rel (0) target = $region69
    $region68: #{deepfm_forward.1} parent=1 // pred_region
      %1475 = dma.done [#allocation4], 16
    $region69: #{deepfm_forward.1} parent=1 // pred_fallthru
      _
    %1476 = vsyncpa [#allocation4], 1

</llo_original>
